<compile_context>
chip_gen: v6e
topology: v6e:2x2x1
jax: 0.10.0
libtpu: 0.0.40
codegen_flags: <defaults>
</compile_context>

<pallas_src>
from functools import partial

import jax
import jax.numpy as jnp
from jax.experimental import pallas as pl
from jax.experimental.pallas import tpu as pltpu

EPS_BN = 1e-5
EPS_NORM = 1e-12

# layer-size chains: (input_dim, *hidden_dims, latent_dim)
X_DIMS = (4, 8, 8, 4, 4)       # x_encoder:        MLP(4,  [8, 8, 4],  4)
ADD_DIMS = (73, 16, 8, 8, 4)   # add_info_encoder: MLP(73, [16, 8, 8], 4)
DEC_DIMS = (8, 8, 4, 4, 4)     # decoder:          MLP(8,  [8, 4, 4],  4)
LATENT = DEC_DIMS[-1]

X_COLS = X_DIMS[0]             # slab cols [0, 4)   = x
ADD_COLS = ADD_DIMS[0]         # slab cols [4, 77)  = add_info
X_HID0 = X_DIMS[1]             # fused depth-0 output cols [0, 8) belong to x


def _round_up(x, m):
    return (x + m - 1) // m * m


SLAB_W = _round_up(X_COLS + ADD_COLS, 8)   # 80 (cols [77, 80) zero padding)


# ---------------------------------------------------------------------------
# Static packing layout (shared by host-side packer and in-kernel slicing)
# ---------------------------------------------------------------------------
def _build_layouts():
    enc, dec = [], []
    w_off, v_off = 0, 0

    n = len(X_DIMS) - 1                                # 4 fused encoder depths
    for i in range(n):
        x_in, a_in = X_DIMS[i], ADD_DIMS[i]
        x_out, a_out = X_DIMS[i + 1], ADD_DIMS[i + 1]
        fin = SLAB_W if i == 0 else x_in + a_in        # depth 0 reads the slab
        fout = x_out + a_out
        hidden = i < n - 1
        enc.append(dict(fin=fin, fout=fout, w_row=w_off, b_row=v_off,
                        g_row=v_off + 1 if hidden else None,
                        bt_row=v_off + 2 if hidden else None,
                        x_in=x_in, a_in=a_in, x_out=x_out, a_out=a_out))
        w_off += _round_up(fin, 8)                     # 8-sublane aligned slices
        v_off += 3 if hidden else 1

    m = len(DEC_DIMS) - 1
    for i in range(m):
        fin, fout = DEC_DIMS[i], DEC_DIMS[i + 1]
        hidden = i < m - 1
        dec.append(dict(fin=fin, fout=fout, w_row=w_off, b_row=v_off,
                        g_row=v_off + 1 if hidden else None,
                        bt_row=v_off + 2 if hidden else None))
        w_off += _round_up(fin, 8)
        v_off += 3 if hidden else 1

    return enc, dec, w_off, v_off


ENC_LAYERS, DEC_LAYERS, W_ROWS, V_ROWS = _build_layouts()
PACK_COLS = max(e['fout'] for e in ENC_LAYERS + DEC_LAYERS)   # 24


# ---------------------------------------------------------------------------
# Kernel helpers (all slices are static -> zero runtime cost)
# ---------------------------------------------------------------------------
def _w(w_ref, e):
    return w_ref[e['w_row']:e['w_row'] + e['fin'], 0:e['fout']]


def _v(v_ref, row, fout):
    return v_ref[row:row + 1, 0:fout]


def _linear(h, e, w_ref, v_ref):
    return (jnp.dot(h, _w(w_ref, e), preferred_element_type=jnp.float32)
            + _v(v_ref, e['b_row'], e['fout']))


def _relu_bn(h, e, v_ref, inv_b):
    """ReLU then training-mode BatchNorm1d (one-pass stats, fused FMA)."""
    h = jnp.maximum(h, 0.0)
    s1 = jnp.sum(h, axis=0, keepdims=True)
    s2 = jnp.sum(h * h, axis=0, keepdims=True)
    mu = s1 * inv_b
    var = jnp.maximum(s2 * inv_b - mu * mu, 0.0)       # biased variance
    gamma = _v(v_ref, e['g_row'], e['fout'])
    beta = _v(v_ref, e['bt_row'], e['fout'])
    scale = gamma * jax.lax.rsqrt(var + EPS_BN)        # (1, N)
    shift = beta - mu * scale                          # (1, N)
    return h * scale + shift


# ---------------------------------------------------------------------------
# Fused forward kernel (one batch tile per grid step)
# ---------------------------------------------------------------------------
def model_kernel(slab_ref, w_ref, v_ref, out_ref):
    inv_b = 1.0 / slab_ref.shape[0]                    # static tile batch size
    slab = slab_ref[...]                               # (TB, 80) = [x | add | 0]

    # F.normalize scale: 1/max(||add_info||, eps) from the add columns only
    # (zero pad columns contribute nothing).  rsqrt runs on the EUP.
    col_in = jax.lax.broadcasted_iota(jnp.int32, slab.shape, 1)
    sq = jnp.where(col_in >= X_COLS, slab * slab, 0.0)
    s = jax.lax.rsqrt(jnp.maximum(jnp.sum(sq, axis=1, keepdims=True),
                                  EPS_NORM * EPS_NORM))

    # Fused encoder depth 0: ONE block-diagonal matmul over the whole slab.
    # Normalize fold: scale only the add-encoder output columns (>= X_HID0)
    # by s *before* adding the bias -> (a @ Wa) * s + ba  ==  (a*s) @ Wa + ba.
    e0 = ENC_LAYERS[0]
    h = jnp.dot(slab, _w(w_ref, e0), preferred_element_type=jnp.float32)
    col_out = jax.lax.broadcasted_iota(jnp.int32, h.shape, 1)
    h = jnp.where(col_out >= X_HID0, h * s, h) + _v(v_ref, e0['b_row'], e0['fout'])
    h = _relu_bn(h, e0, v_ref, inv_b)

    # Remaining fused encoder depths (block-diagonal weights, shared BN pass;
    # per-column stats are exact since x / add column sets are disjoint).
    for e in ENC_LAYERS[1:-1]:
        h = _relu_bn(_linear(h, e, w_ref, v_ref), e, v_ref, inv_b)
    lat = _linear(h, ENC_LAYERS[-1], w_ref, v_ref)     # (TB, 8) = [x_lat | add_lat]

    # Decoder (first layer reads the combined latent directly -- no concat).
    h = lat
    for e in DEC_LAYERS[:-1]:
        h = _relu_bn(_linear(h, e, w_ref, v_ref), e, v_ref, inv_b)
    dec = _linear(h, DEC_LAYERS[-1], w_ref, v_ref)

    out_ref[...] = jnp.maximum(dec, 0.0)


# ---------------------------------------------------------------------------
# Parameter init (matches PyTorch nn.Linear default init bounds)
# ---------------------------------------------------------------------------
def init_mlp_params(key, dims):
    params = []
    n = len(dims) - 1
    keys = jax.random.split(key, n)
    for i in range(n):
        fan_in, fan_out = dims[i], dims[i + 1]
        kw, kb = jax.random.split(keys[i])
        bound = 1.0 / (fan_in ** 0.5)
        w = jax.random.uniform(kw, (fan_in, fan_out), jnp.float32, -bound, bound)
        b = jax.random.uniform(kb, (1, fan_out), jnp.float32, -bound, bound)
        params += [w, b]
        if i < n - 1:                                  # hidden -> BatchNorm params
            params += [jnp.ones((1, fan_out), jnp.float32),
                       jnp.zeros((1, fan_out), jnp.float32)]
    return params


def pack_params(x_params, add_params, dec_params):
    """Pack all params into two tiny f32 blobs with block-diagonal encoders."""
    w_blob = jnp.zeros((W_ROWS, PACK_COLS), jnp.float32)
    v_blob = jnp.zeros((V_ROWS, PACK_COLS), jnp.float32)

    xi, ai = iter(x_params), iter(add_params)
    for e in ENC_LAYERS:
        wx, bx = next(xi), next(xi)
        wa, ba = next(ai), next(ai)
        r, x_in, a_in, x_out = e['w_row'], e['x_in'], e['a_in'], e['x_out']
        # x block: input rows [0, x_in) -> output cols [0, x_out)
        w_blob = w_blob.at[r:r + x_in, 0:x_out].set(wx)
        # add block: input rows [x_in, x_in+a_in) -> output cols [x_out, fout)
        w_blob = w_blob.at[r + x_in:r + x_in + a_in, x_out:e['fout']].set(wa)
        v_blob = v_blob.at[e['b_row'], 0:x_out].set(bx.reshape(-1))
        v_blob = v_blob.at[e['b_row'], x_out:e['fout']].set(ba.reshape(-1))
        if e['g_row'] is not None:
            gx, btx = next(xi), next(xi)
            ga, bta = next(ai), next(ai)
            v_blob = v_blob.at[e['g_row'], 0:x_out].set(gx.reshape(-1))
            v_blob = v_blob.at[e['g_row'], x_out:e['fout']].set(ga.reshape(-1))
            v_blob = v_blob.at[e['bt_row'], 0:x_out].set(btx.reshape(-1))
            v_blob = v_blob.at[e['bt_row'], x_out:e['fout']].set(bta.reshape(-1))

    di = iter(dec_params)
    for e in DEC_LAYERS:
        w, b = next(di), next(di)
        w_blob = w_blob.at[e['w_row']:e['w_row'] + e['fin'], 0:e['fout']].set(w)
        v_blob = v_blob.at[e['b_row'], 0:e['fout']].set(b.reshape(-1))
        if e['g_row'] is not None:
            g, bt = next(di), next(di)
            v_blob = v_blob.at[e['g_row'], 0:e['fout']].set(g.reshape(-1))
            v_blob = v_blob.at[e['bt_row'], 0:e['fout']].set(bt.reshape(-1))
    return w_blob, v_blob


def build_slab(x, add_info):
    """One lane-friendly (B, 80) activation slab: [x | add_info | zero pad]."""
    batch = x.shape[0]
    slab = jnp.zeros((batch, SLAB_W), jnp.float32)
    slab = slab.at[:, 0:X_COLS].set(x)
    slab = slab.at[:, X_COLS:X_COLS + ADD_COLS].set(add_info)
    return slab


# ---------------------------------------------------------------------------
# Wrapper: batch-tiled, grid-pipelined throughput kernel
# ---------------------------------------------------------------------------
@partial(jax.jit, static_argnames=("block_batch",))
def mlp_model_forward(slab, w_blob, v_blob, block_batch=1024):
    batch = slab.shape[0]
    tb = min(block_batch, batch)
    # NOTE: when batch > tb BatchNorm statistics become per-tile ("ghost batch
    # norm"); exact PyTorch full-batch semantics require batch <= block_batch.
    assert batch % tb == 0 and (tb == batch or tb % 8 == 0), \
        "batch must be a multiple of the batch tile (tile multiple of 8)"
    grid = (batch // tb,)
    return pl.pallas_call(
        model_kernel,
        out_shape=jax.ShapeDtypeStruct((batch, LATENT), jnp.float32),
        grid_spec=pltpu.PrefetchScalarGridSpec(
            num_scalar_prefetch=0,
            grid=grid,
            in_specs=[
                pl.BlockSpec((tb, SLAB_W), lambda i: (i, 0)),          # act tile
                pl.BlockSpec((W_ROWS, PACK_COLS), lambda i: (0, 0)),   # resident
                pl.BlockSpec((V_ROWS, PACK_COLS), lambda i: (0, 0)),   # resident
            ],
            out_specs=pl.BlockSpec((tb, LATENT), lambda i: (i, 0)),
        ),
        # "parallel" shards batch tiles across the 2 TCs on v7x; no-op v5e/v6e.
        # For large block_batch sweeps also raise vmem_limit_bytes here.
        compiler_params=pltpu.CompilerParams(
            dimension_semantics=("parallel",)),
    )(slab, w_blob, v_blob)


# ---------------------------------------------------------------------------
# Pure-JAX reference (two-pass BN, explicit normalize & concat) for checking
# ---------------------------------------------------------------------------
def _mlp_ref(h, params, n_hidden):
    it = iter(params)
    for _ in range(n_hidden):
        w, b, g, beta = next(it), next(it), next(it), next(it)
        h = jnp.maximum(h @ w + b, 0.0)
        mu = jnp.mean(h, axis=0, keepdims=True)
        var = jnp.mean((h - mu) ** 2, axis=0, keepdims=True)
        h = (h - mu) / jnp.sqrt(var + EPS_BN) * g + beta
    w, b = next(it), next(it)
    return h @ w + b


def model_ref(x, add_info, x_params, add_params, dec_params):
    x_lat = _mlp_ref(x, x_params, 3)
    a = add_info / jnp.maximum(
        jnp.sqrt(jnp.sum(add_info * add_info, axis=1, keepdims=True)), EPS_NORM)
    add_lat = _mlp_ref(a, add_params, 3)
    dec = _mlp_ref(jnp.concatenate([x_lat, add_lat], axis=1), dec_params, 3)
    return jnp.maximum(dec, 0.0)


if __name__ == "__main__":
    key = jax.random.PRNGKey(0)
    kx, ka, kp1, kp2, kp3 = jax.random.split(key, 5)

    batch = 64                                   # <= block_batch -> exact full-batch BN
    x = jax.random.normal(kx, (batch, X_COLS), jnp.float32)
    add_info = jax.random.normal(ka, (batch, ADD_COLS), jnp.float32)

    x_params = init_mlp_params(kp1, X_DIMS)
    add_params = init_mlp_params(kp2, ADD_DIMS)
    dec_params = init_mlp_params(kp3, DEC_DIMS)
    w_blob, v_blob = pack_params(x_params, add_params, dec_params)

    slab = build_slab(x, add_info)
    out = mlp_model_forward(slab, w_blob, v_blob)
    jax.block_until_ready(out)

    ref = model_ref(x, add_info, x_params, add_params, dec_params)
    assert out.shape == (batch, LATENT)
    assert jnp.allclose(out, ref, rtol=2e-3, atol=2e-3)

    print("KERNEL_OK")
</pallas_src>

<mosaic_0001>
module attributes {stable_mosaic.version = 11 : i64} {
  func.func @model_kernel(%arg0: i32, %arg1: memref<64x80xf32, #tpu.memory_space<vmem>>, %arg2: memref<168x24xf32, #tpu.memory_space<vmem>>, %arg3: memref<20x24xf32, #tpu.memory_space<vmem>>, %arg4: memref<64x4xf32, #tpu.memory_space<vmem>>) attributes {dimension_semantics = [#tpu.dimension_semantics<parallel>], iteration_bounds = array<i64: 1>, scalar_prefetch = 0 : i64, scratch_operands = 0 : i64, tpu.core_type = #tpu.core_type<tc>, window_params = [{transform_indices = @transform_0, window_bounds = array<i64: 64, 80>}, {pipeline_mode = #tpu.pipeline_mode<synchronous>, transform_indices = @transform_1, window_bounds = array<i64: 168, 24>}, {pipeline_mode = #tpu.pipeline_mode<synchronous>, transform_indices = @transform_2, window_bounds = array<i64: 20, 24>}, {transform_indices = @transform_3, window_bounds = array<i64: 64, 4>}]} {
    %c0 = arith.constant 0 : index
    %c0_0 = arith.constant 0 : index
    %0 = vector.load %arg1[%c0, %c0_0] : memref<64x80xf32, #tpu.memory_space<vmem>>, vector<64x80xf32>
    %1 = tpu.iota {dimensions = array<i32: 1>} : vector<64x80xi32>
    %c4_i32 = arith.constant 4 : i32
    %2 = vector.broadcast %c4_i32 : i32 to vector<64x80xi32>
    %3 = arith.cmpi sge, %1, %2 : vector<64x80xi32>
    %4 = arith.mulf %0, %0 : vector<64x80xf32>
    %cst = arith.constant 0.000000e+00 : f32
    %5 = vector.broadcast %cst : f32 to vector<64x80xf32>
    %6 = arith.select %3, %4, %5 : vector<64x80xi1>, vector<64x80xf32>
    %cst_1 = arith.constant dense<0.000000e+00> : vector<64xf32>
    %7 = vector.multi_reduction <add>, %6, %cst_1 [1] : vector<64x80xf32> to vector<64xf32>
    %8 = vector.shape_cast %7 : vector<64xf32> to vector<64x1xf32>
    %cst_2 = arith.constant 1.000000e-24 : f32
    %9 = vector.broadcast %cst_2 : f32 to vector<64x1xf32>
    %10 = arith.maximumf %8, %9 : vector<64x1xf32>
    %11 = math.rsqrt %10 : vector<64x1xf32>
    %c0_3 = arith.constant 0 : index
    %c0_4 = arith.constant 0 : index
    %12 = vector.load %arg2[%c0_3, %c0_4] : memref<168x24xf32, #tpu.memory_space<vmem>>, vector<80x24xf32>
    %cst_5 = arith.constant dense<0.000000e+00> : vector<64x24xf32>
    %13 = tpu.matmul %0, %12, %cst_5 {dimension_numbers = #tpu.dot_dimension_numbers<[1], [0], [0], [1], [0, 0, 1, 1], [], []>} : vector<64x80xf32>, vector<80x24xf32>, vector<64x24xf32> -> vector<64x24xf32>
    %14 = tpu.iota {dimensions = array<i32: 1>} : vector<64x24xi32>
    %c8_i32 = arith.constant 8 : i32
    %15 = vector.broadcast %c8_i32 : i32 to vector<64x24xi32>
    %16 = arith.cmpi sge, %14, %15 : vector<64x24xi32>
    %17 = vector.broadcast %11 : vector<64x1xf32> to vector<64x24xf32>
    %18 = arith.mulf %13, %17 : vector<64x24xf32>
    %19 = arith.select %16, %18, %13 : vector<64x24xi1>, vector<64x24xf32>
    %c0_6 = arith.constant 0 : index
    %c0_7 = arith.constant 0 : index
    %20 = vector.load %arg3[%c0_6, %c0_7] : memref<20x24xf32, #tpu.memory_space<vmem>>, vector<1x24xf32>
    %21 = vector.broadcast %20 : vector<1x24xf32> to vector<64x24xf32>
    %22 = arith.addf %19, %21 : vector<64x24xf32>
    %cst_8 = arith.constant 0.000000e+00 : f32
    %23 = vector.broadcast %cst_8 : f32 to vector<64x24xf32>
    %24 = arith.maximumf %22, %23 : vector<64x24xf32>
    %cst_9 = arith.constant dense<0.000000e+00> : vector<24xf32>
    %25 = vector.multi_reduction <add>, %24, %cst_9 [0] : vector<64x24xf32> to vector<24xf32>
    %26 = vector.shape_cast %25 : vector<24xf32> to vector<1x24xf32>
    %27 = arith.mulf %24, %24 : vector<64x24xf32>
    %cst_10 = arith.constant dense<0.000000e+00> : vector<24xf32>
    %28 = vector.multi_reduction <add>, %27, %cst_10 [0] : vector<64x24xf32> to vector<24xf32>
    %29 = vector.shape_cast %28 : vector<24xf32> to vector<1x24xf32>
    %cst_11 = arith.constant 1.562500e-02 : f32
    %30 = vector.broadcast %cst_11 : f32 to vector<1x24xf32>
    %31 = arith.mulf %26, %30 : vector<1x24xf32>
    %cst_12 = arith.constant 1.562500e-02 : f32
    %32 = vector.broadcast %cst_12 : f32 to vector<1x24xf32>
    %33 = arith.mulf %29, %32 : vector<1x24xf32>
    %34 = arith.mulf %31, %31 : vector<1x24xf32>
    %35 = arith.subf %33, %34 : vector<1x24xf32>
    %cst_13 = arith.constant 0.000000e+00 : f32
    %36 = vector.broadcast %cst_13 : f32 to vector<1x24xf32>
    %37 = arith.maximumf %35, %36 : vector<1x24xf32>
    %c1 = arith.constant 1 : index
    %c0_14 = arith.constant 0 : index
    %38 = vector.load %arg3[%c1, %c0_14] : memref<20x24xf32, #tpu.memory_space<vmem>>, vector<1x24xf32>
    %c2 = arith.constant 2 : index
    %c0_15 = arith.constant 0 : index
    %39 = vector.load %arg3[%c2, %c0_15] : memref<20x24xf32, #tpu.memory_space<vmem>>, vector<1x24xf32>
    %cst_16 = arith.constant 9.99999974E-6 : f32
    %40 = vector.broadcast %cst_16 : f32 to vector<1x24xf32>
    %41 = arith.addf %37, %40 : vector<1x24xf32>
    %42 = math.rsqrt %41 : vector<1x24xf32>
    %43 = arith.mulf %38, %42 : vector<1x24xf32>
    %44 = arith.mulf %31, %43 : vector<1x24xf32>
    %45 = arith.subf %39, %44 : vector<1x24xf32>
    %46 = vector.broadcast %43 : vector<1x24xf32> to vector<64x24xf32>
    %47 = arith.mulf %24, %46 : vector<64x24xf32>
    %48 = vector.broadcast %45 : vector<1x24xf32> to vector<64x24xf32>
    %49 = arith.addf %47, %48 : vector<64x24xf32>
    %c80 = arith.constant 80 : index
    %c0_17 = arith.constant 0 : index
    %50 = vector.load %arg2[%c80, %c0_17] : memref<168x24xf32, #tpu.memory_space<vmem>>, vector<24x16xf32>
    %cst_18 = arith.constant dense<0.000000e+00> : vector<64x16xf32>
    %51 = tpu.matmul %49, %50, %cst_18 {dimension_numbers = #tpu.dot_dimension_numbers<[1], [0], [0], [1], [0, 0, 1, 1], [], []>} : vector<64x24xf32>, vector<24x16xf32>, vector<64x16xf32> -> vector<64x16xf32>
    %c3 = arith.constant 3 : index
    %c0_19 = arith.constant 0 : index
    %52 = vector.load %arg3[%c3, %c0_19] : memref<20x24xf32, #tpu.memory_space<vmem>>, vector<1x16xf32>
    %53 = vector.broadcast %52 : vector<1x16xf32> to vector<64x16xf32>
    %54 = arith.addf %51, %53 : vector<64x16xf32>
    %cst_20 = arith.constant 0.000000e+00 : f32
    %55 = vector.broadcast %cst_20 : f32 to vector<64x16xf32>
    %56 = arith.maximumf %54, %55 : vector<64x16xf32>
    %cst_21 = arith.constant dense<0.000000e+00> : vector<16xf32>
    %57 = vector.multi_reduction <add>, %56, %cst_21 [0] : vector<64x16xf32> to vector<16xf32>
    %58 = vector.shape_cast %57 : vector<16xf32> to vector<1x16xf32>
    %59 = arith.mulf %56, %56 : vector<64x16xf32>
    %cst_22 = arith.constant dense<0.000000e+00> : vector<16xf32>
    %60 = vector.multi_reduction <add>, %59, %cst_22 [0] : vector<64x16xf32> to vector<16xf32>
    %61 = vector.shape_cast %60 : vector<16xf32> to vector<1x16xf32>
    %cst_23 = arith.constant 1.562500e-02 : f32
    %62 = vector.broadcast %cst_23 : f32 to vector<1x16xf32>
    %63 = arith.mulf %58, %62 : vector<1x16xf32>
    %cst_24 = arith.constant 1.562500e-02 : f32
    %64 = vector.broadcast %cst_24 : f32 to vector<1x16xf32>
    %65 = arith.mulf %61, %64 : vector<1x16xf32>
    %66 = arith.mulf %63, %63 : vector<1x16xf32>
    %67 = arith.subf %65, %66 : vector<1x16xf32>
    %cst_25 = arith.constant 0.000000e+00 : f32
    %68 = vector.broadcast %cst_25 : f32 to vector<1x16xf32>
    %69 = arith.maximumf %67, %68 : vector<1x16xf32>
    %c4 = arith.constant 4 : index
    %c0_26 = arith.constant 0 : index
    %70 = vector.load %arg3[%c4, %c0_26] : memref<20x24xf32, #tpu.memory_space<vmem>>, vector<1x16xf32>
    %c5 = arith.constant 5 : index
    %c0_27 = arith.constant 0 : index
    %71 = vector.load %arg3[%c5, %c0_27] : memref<20x24xf32, #tpu.memory_space<vmem>>, vector<1x16xf32>
    %cst_28 = arith.constant 9.99999974E-6 : f32
    %72 = vector.broadcast %cst_28 : f32 to vector<1x16xf32>
    %73 = arith.addf %69, %72 : vector<1x16xf32>
    %74 = math.rsqrt %73 : vector<1x16xf32>
    %75 = arith.mulf %70, %74 : vector<1x16xf32>
    %76 = arith.mulf %63, %75 : vector<1x16xf32>
    %77 = arith.subf %71, %76 : vector<1x16xf32>
    %78 = vector.broadcast %75 : vector<1x16xf32> to vector<64x16xf32>
    %79 = arith.mulf %56, %78 : vector<64x16xf32>
    %80 = vector.broadcast %77 : vector<1x16xf32> to vector<64x16xf32>
    %81 = arith.addf %79, %80 : vector<64x16xf32>
    %c104 = arith.constant 104 : index
    %c0_29 = arith.constant 0 : index
    %82 = vector.load %arg2[%c104, %c0_29] : memref<168x24xf32, #tpu.memory_space<vmem>>, vector<16x12xf32>
    %cst_30 = arith.constant dense<0.000000e+00> : vector<64x12xf32>
    %83 = tpu.matmul %81, %82, %cst_30 {dimension_numbers = #tpu.dot_dimension_numbers<[1], [0], [0], [1], [0, 0, 1, 1], [], []>} : vector<64x16xf32>, vector<16x12xf32>, vector<64x12xf32> -> vector<64x12xf32>
    %c6 = arith.constant 6 : index
    %c0_31 = arith.constant 0 : index
    %84 = vector.load %arg3[%c6, %c0_31] : memref<20x24xf32, #tpu.memory_space<vmem>>, vector<1x12xf32>
    %85 = vector.broadcast %84 : vector<1x12xf32> to vector<64x12xf32>
    %86 = arith.addf %83, %85 : vector<64x12xf32>
    %cst_32 = arith.constant 0.000000e+00 : f32
    %87 = vector.broadcast %cst_32 : f32 to vector<64x12xf32>
    %88 = arith.maximumf %86, %87 : vector<64x12xf32>
    %cst_33 = arith.constant dense<0.000000e+00> : vector<12xf32>
    %89 = vector.multi_reduction <add>, %88, %cst_33 [0] : vector<64x12xf32> to vector<12xf32>
    %90 = vector.shape_cast %89 : vector<12xf32> to vector<1x12xf32>
    %91 = arith.mulf %88, %88 : vector<64x12xf32>
    %cst_34 = arith.constant dense<0.000000e+00> : vector<12xf32>
    %92 = vector.multi_reduction <add>, %91, %cst_34 [0] : vector<64x12xf32> to vector<12xf32>
    %93 = vector.shape_cast %92 : vector<12xf32> to vector<1x12xf32>
    %cst_35 = arith.constant 1.562500e-02 : f32
    %94 = vector.broadcast %cst_35 : f32 to vector<1x12xf32>
    %95 = arith.mulf %90, %94 : vector<1x12xf32>
    %cst_36 = arith.constant 1.562500e-02 : f32
    %96 = vector.broadcast %cst_36 : f32 to vector<1x12xf32>
    %97 = arith.mulf %93, %96 : vector<1x12xf32>
    %98 = arith.mulf %95, %95 : vector<1x12xf32>
    %99 = arith.subf %97, %98 : vector<1x12xf32>
    %cst_37 = arith.constant 0.000000e+00 : f32
    %100 = vector.broadcast %cst_37 : f32 to vector<1x12xf32>
    %101 = arith.maximumf %99, %100 : vector<1x12xf32>
    %c7 = arith.constant 7 : index
    %c0_38 = arith.constant 0 : index
    %102 = vector.load %arg3[%c7, %c0_38] : memref<20x24xf32, #tpu.memory_space<vmem>>, vector<1x12xf32>
    %c8 = arith.constant 8 : index
    %c0_39 = arith.constant 0 : index
    %103 = vector.load %arg3[%c8, %c0_39] : memref<20x24xf32, #tpu.memory_space<vmem>>, vector<1x12xf32>
    %cst_40 = arith.constant 9.99999974E-6 : f32
    %104 = vector.broadcast %cst_40 : f32 to vector<1x12xf32>
    %105 = arith.addf %101, %104 : vector<1x12xf32>
    %106 = math.rsqrt %105 : vector<1x12xf32>
    %107 = arith.mulf %102, %106 : vector<1x12xf32>
    %108 = arith.mulf %95, %107 : vector<1x12xf32>
    %109 = arith.subf %103, %108 : vector<1x12xf32>
    %110 = vector.broadcast %107 : vector<1x12xf32> to vector<64x12xf32>
    %111 = arith.mulf %88, %110 : vector<64x12xf32>
    %112 = vector.broadcast %109 : vector<1x12xf32> to vector<64x12xf32>
    %113 = arith.addf %111, %112 : vector<64x12xf32>
    %c120 = arith.constant 120 : index
    %c0_41 = arith.constant 0 : index
    %114 = vector.load %arg2[%c120, %c0_41] : memref<168x24xf32, #tpu.memory_space<vmem>>, vector<12x8xf32>
    %cst_42 = arith.constant dense<0.000000e+00> : vector<64x8xf32>
    %115 = tpu.matmul %113, %114, %cst_42 {dimension_numbers = #tpu.dot_dimension_numbers<[1], [0], [0], [1], [0, 0, 1, 1], [], []>} : vector<64x12xf32>, vector<12x8xf32>, vector<64x8xf32> -> vector<64x8xf32>
    %c9 = arith.constant 9 : index
    %c0_43 = arith.constant 0 : index
    %116 = vector.load %arg3[%c9, %c0_43] : memref<20x24xf32, #tpu.memory_space<vmem>>, vector<1x8xf32>
    %117 = vector.broadcast %116 : vector<1x8xf32> to vector<64x8xf32>
    %118 = arith.addf %115, %117 : vector<64x8xf32>
    %c136 = arith.constant 136 : index
    %c0_44 = arith.constant 0 : index
    %119 = vector.load %arg2[%c136, %c0_44] : memref<168x24xf32, #tpu.memory_space<vmem>>, vector<8x8xf32>
    %cst_45 = arith.constant dense<0.000000e+00> : vector<64x8xf32>
    %120 = tpu.matmul %118, %119, %cst_45 {dimension_numbers = #tpu.dot_dimension_numbers<[1], [0], [0], [1], [0, 0, 1, 1], [], []>} : vector<64x8xf32>, vector<8x8xf32>, vector<64x8xf32> -> vector<64x8xf32>
    %c10 = arith.constant 10 : index
    %c0_46 = arith.constant 0 : index
    %121 = vector.load %arg3[%c10, %c0_46] : memref<20x24xf32, #tpu.memory_space<vmem>>, vector<1x8xf32>
    %122 = vector.broadcast %121 : vector<1x8xf32> to vector<64x8xf32>
    %123 = arith.addf %120, %122 : vector<64x8xf32>
    %cst_47 = arith.constant 0.000000e+00 : f32
    %124 = vector.broadcast %cst_47 : f32 to vector<64x8xf32>
    %125 = arith.maximumf %123, %124 : vector<64x8xf32>
    %cst_48 = arith.constant dense<0.000000e+00> : vector<8xf32>
    %126 = vector.multi_reduction <add>, %125, %cst_48 [0] : vector<64x8xf32> to vector<8xf32>
    %127 = vector.shape_cast %126 : vector<8xf32> to vector<1x8xf32>
    %128 = arith.mulf %125, %125 : vector<64x8xf32>
    %cst_49 = arith.constant dense<0.000000e+00> : vector<8xf32>
    %129 = vector.multi_reduction <add>, %128, %cst_49 [0] : vector<64x8xf32> to vector<8xf32>
    %130 = vector.shape_cast %129 : vector<8xf32> to vector<1x8xf32>
    %cst_50 = arith.constant 1.562500e-02 : f32
    %131 = vector.broadcast %cst_50 : f32 to vector<1x8xf32>
    %132 = arith.mulf %127, %131 : vector<1x8xf32>
    %cst_51 = arith.constant 1.562500e-02 : f32
    %133 = vector.broadcast %cst_51 : f32 to vector<1x8xf32>
    %134 = arith.mulf %130, %133 : vector<1x8xf32>
    %135 = arith.mulf %132, %132 : vector<1x8xf32>
    %136 = arith.subf %134, %135 : vector<1x8xf32>
    %cst_52 = arith.constant 0.000000e+00 : f32
    %137 = vector.broadcast %cst_52 : f32 to vector<1x8xf32>
    %138 = arith.maximumf %136, %137 : vector<1x8xf32>
    %c11 = arith.constant 11 : index
    %c0_53 = arith.constant 0 : index
    %139 = vector.load %arg3[%c11, %c0_53] : memref<20x24xf32, #tpu.memory_space<vmem>>, vector<1x8xf32>
    %c12 = arith.constant 12 : index
    %c0_54 = arith.constant 0 : index
    %140 = vector.load %arg3[%c12, %c0_54] : memref<20x24xf32, #tpu.memory_space<vmem>>, vector<1x8xf32>
    %cst_55 = arith.constant 9.99999974E-6 : f32
    %141 = vector.broadcast %cst_55 : f32 to vector<1x8xf32>
    %142 = arith.addf %138, %141 : vector<1x8xf32>
    %143 = math.rsqrt %142 : vector<1x8xf32>
    %144 = arith.mulf %139, %143 : vector<1x8xf32>
    %145 = arith.mulf %132, %144 : vector<1x8xf32>
    %146 = arith.subf %140, %145 : vector<1x8xf32>
    %147 = vector.broadcast %144 : vector<1x8xf32> to vector<64x8xf32>
    %148 = arith.mulf %125, %147 : vector<64x8xf32>
    %149 = vector.broadcast %146 : vector<1x8xf32> to vector<64x8xf32>
    %150 = arith.addf %148, %149 : vector<64x8xf32>
    %c144 = arith.constant 144 : index
    %c0_56 = arith.constant 0 : index
    %151 = vector.load %arg2[%c144, %c0_56] : memref<168x24xf32, #tpu.memory_space<vmem>>, vector<8x4xf32>
    %cst_57 = arith.constant dense<0.000000e+00> : vector<64x4xf32>
    %152 = tpu.matmul %150, %151, %cst_57 {dimension_numbers = #tpu.dot_dimension_numbers<[1], [0], [0], [1], [0, 0, 1, 1], [], []>} : vector<64x8xf32>, vector<8x4xf32>, vector<64x4xf32> -> vector<64x4xf32>
    %c13 = arith.constant 13 : index
    %c0_58 = arith.constant 0 : index
    %153 = vector.load %arg3[%c13, %c0_58] : memref<20x24xf32, #tpu.memory_space<vmem>>, vector<1x4xf32>
    %154 = vector.broadcast %153 : vector<1x4xf32> to vector<64x4xf32>
    %155 = arith.addf %152, %154 : vector<64x4xf32>
    %cst_59 = arith.constant 0.000000e+00 : f32
    %156 = vector.broadcast %cst_59 : f32 to vector<64x4xf32>
    %157 = arith.maximumf %155, %156 : vector<64x4xf32>
    %cst_60 = arith.constant dense<0.000000e+00> : vector<4xf32>
    %158 = vector.multi_reduction <add>, %157, %cst_60 [0] : vector<64x4xf32> to vector<4xf32>
    %159 = vector.shape_cast %158 : vector<4xf32> to vector<1x4xf32>
    %160 = arith.mulf %157, %157 : vector<64x4xf32>
    %cst_61 = arith.constant dense<0.000000e+00> : vector<4xf32>
    %161 = vector.multi_reduction <add>, %160, %cst_61 [0] : vector<64x4xf32> to vector<4xf32>
    %162 = vector.shape_cast %161 : vector<4xf32> to vector<1x4xf32>
    %cst_62 = arith.constant 1.562500e-02 : f32
    %163 = vector.broadcast %cst_62 : f32 to vector<1x4xf32>
    %164 = arith.mulf %159, %163 : vector<1x4xf32>
    %cst_63 = arith.constant 1.562500e-02 : f32
    %165 = vector.broadcast %cst_63 : f32 to vector<1x4xf32>
    %166 = arith.mulf %162, %165 : vector<1x4xf32>
    %167 = arith.mulf %164, %164 : vector<1x4xf32>
    %168 = arith.subf %166, %167 : vector<1x4xf32>
    %cst_64 = arith.constant 0.000000e+00 : f32
    %169 = vector.broadcast %cst_64 : f32 to vector<1x4xf32>
    %170 = arith.maximumf %168, %169 : vector<1x4xf32>
    %c14 = arith.constant 14 : index
    %c0_65 = arith.constant 0 : index
    %171 = vector.load %arg3[%c14, %c0_65] : memref<20x24xf32, #tpu.memory_space<vmem>>, vector<1x4xf32>
    %c15 = arith.constant 15 : index
    %c0_66 = arith.constant 0 : index
    %172 = vector.load %arg3[%c15, %c0_66] : memref<20x24xf32, #tpu.memory_space<vmem>>, vector<1x4xf32>
    %cst_67 = arith.constant 9.99999974E-6 : f32
    %173 = vector.broadcast %cst_67 : f32 to vector<1x4xf32>
    %174 = arith.addf %170, %173 : vector<1x4xf32>
    %175 = math.rsqrt %174 : vector<1x4xf32>
    %176 = arith.mulf %171, %175 : vector<1x4xf32>
    %177 = arith.mulf %164, %176 : vector<1x4xf32>
    %178 = arith.subf %172, %177 : vector<1x4xf32>
    %179 = vector.broadcast %176 : vector<1x4xf32> to vector<64x4xf32>
    %180 = arith.mulf %157, %179 : vector<64x4xf32>
    %181 = vector.broadcast %178 : vector<1x4xf32> to vector<64x4xf32>
    %182 = arith.addf %180, %181 : vector<64x4xf32>
    %c152 = arith.constant 152 : index
    %c0_68 = arith.constant 0 : index
    %183 = vector.load %arg2[%c152, %c0_68] : memref<168x24xf32, #tpu.memory_space<vmem>>, vector<4x4xf32>
    %cst_69 = arith.constant dense<0.000000e+00> : vector<64x4xf32>
    %184 = tpu.matmul %182, %183, %cst_69 {dimension_numbers = #tpu.dot_dimension_numbers<[1], [0], [0], [1], [0, 0, 1, 1], [], []>} : vector<64x4xf32>, vector<4x4xf32>, vector<64x4xf32> -> vector<64x4xf32>
    %c16 = arith.constant 16 : index
    %c0_70 = arith.constant 0 : index
    %185 = vector.load %arg3[%c16, %c0_70] : memref<20x24xf32, #tpu.memory_space<vmem>>, vector<1x4xf32>
    %186 = vector.broadcast %185 : vector<1x4xf32> to vector<64x4xf32>
    %187 = arith.addf %184, %186 : vector<64x4xf32>
    %cst_71 = arith.constant 0.000000e+00 : f32
    %188 = vector.broadcast %cst_71 : f32 to vector<64x4xf32>
    %189 = arith.maximumf %187, %188 : vector<64x4xf32>
    %cst_72 = arith.constant dense<0.000000e+00> : vector<4xf32>
    %190 = vector.multi_reduction <add>, %189, %cst_72 [0] : vector<64x4xf32> to vector<4xf32>
    %191 = vector.shape_cast %190 : vector<4xf32> to vector<1x4xf32>
    %192 = arith.mulf %189, %189 : vector<64x4xf32>
    %cst_73 = arith.constant dense<0.000000e+00> : vector<4xf32>
    %193 = vector.multi_reduction <add>, %192, %cst_73 [0] : vector<64x4xf32> to vector<4xf32>
    %194 = vector.shape_cast %193 : vector<4xf32> to vector<1x4xf32>
    %cst_74 = arith.constant 1.562500e-02 : f32
    %195 = vector.broadcast %cst_74 : f32 to vector<1x4xf32>
    %196 = arith.mulf %191, %195 : vector<1x4xf32>
    %cst_75 = arith.constant 1.562500e-02 : f32
    %197 = vector.broadcast %cst_75 : f32 to vector<1x4xf32>
    %198 = arith.mulf %194, %197 : vector<1x4xf32>
    %199 = arith.mulf %196, %196 : vector<1x4xf32>
    %200 = arith.subf %198, %199 : vector<1x4xf32>
    %cst_76 = arith.constant 0.000000e+00 : f32
    %201 = vector.broadcast %cst_76 : f32 to vector<1x4xf32>
    %202 = arith.maximumf %200, %201 : vector<1x4xf32>
    %c17 = arith.constant 17 : index
    %c0_77 = arith.constant 0 : index
    %203 = vector.load %arg3[%c17, %c0_77] : memref<20x24xf32, #tpu.memory_space<vmem>>, vector<1x4xf32>
    %c18 = arith.constant 18 : index
    %c0_78 = arith.constant 0 : index
    %204 = vector.load %arg3[%c18, %c0_78] : memref<20x24xf32, #tpu.memory_space<vmem>>, vector<1x4xf32>
    %cst_79 = arith.constant 9.99999974E-6 : f32
    %205 = vector.broadcast %cst_79 : f32 to vector<1x4xf32>
    %206 = arith.addf %202, %205 : vector<1x4xf32>
    %207 = math.rsqrt %206 : vector<1x4xf32>
    %208 = arith.mulf %203, %207 : vector<1x4xf32>
    %209 = arith.mulf %196, %208 : vector<1x4xf32>
    %210 = arith.subf %204, %209 : vector<1x4xf32>
    %211 = vector.broadcast %208 : vector<1x4xf32> to vector<64x4xf32>
    %212 = arith.mulf %189, %211 : vector<64x4xf32>
    %213 = vector.broadcast %210 : vector<1x4xf32> to vector<64x4xf32>
    %214 = arith.addf %212, %213 : vector<64x4xf32>
    %c160 = arith.constant 160 : index
    %c0_80 = arith.constant 0 : index
    %215 = vector.load %arg2[%c160, %c0_80] : memref<168x24xf32, #tpu.memory_space<vmem>>, vector<4x4xf32>
    %cst_81 = arith.constant dense<0.000000e+00> : vector<64x4xf32>
    %216 = tpu.matmul %214, %215, %cst_81 {dimension_numbers = #tpu.dot_dimension_numbers<[1], [0], [0], [1], [0, 0, 1, 1], [], []>} : vector<64x4xf32>, vector<4x4xf32>, vector<64x4xf32> -> vector<64x4xf32>
    %c19 = arith.constant 19 : index
    %c0_82 = arith.constant 0 : index
    %217 = vector.load %arg3[%c19, %c0_82] : memref<20x24xf32, #tpu.memory_space<vmem>>, vector<1x4xf32>
    %218 = vector.broadcast %217 : vector<1x4xf32> to vector<64x4xf32>
    %219 = arith.addf %216, %218 : vector<64x4xf32>
    %cst_83 = arith.constant 0.000000e+00 : f32
    %220 = vector.broadcast %cst_83 : f32 to vector<64x4xf32>
    %221 = arith.maximumf %219, %220 : vector<64x4xf32>
    %c0_84 = arith.constant 0 : index
    %c0_85 = arith.constant 0 : index
    %222 = vector.load %arg4[%c0_84, %c0_85] : memref<64x4xf32, #tpu.memory_space<vmem>>, vector<64x4xf32>
    tpu.vector_store %arg4[%c0_84, %c0_85], %221 {strides = array<i32>} : memref<64x4xf32, #tpu.memory_space<vmem>>, vector<64x4xf32>,
    return
  }
  func.func @transform_0(%arg0: i32) -> (i32, i32) {
    %c0_i32 = arith.constant 0 : i32
    %c0_i32_0 = arith.constant 0 : i32
    return %arg0, %c0_i32 : i32, i32
  }
  func.func @transform_1(%arg0: i32) -> (i32, i32) {
    %c0_i32 = arith.constant 0 : i32
    %c0_i32_0 = arith.constant 0 : i32
    %c0_i32_1 = arith.constant 0 : i32
    return %c0_i32, %c0_i32_0 : i32, i32
  }
  func.func @transform_2(%arg0: i32) -> (i32, i32) {
    %c0_i32 = arith.constant 0 : i32
    %c0_i32_0 = arith.constant 0 : i32
    %c0_i32_1 = arith.constant 0 : i32
    return %c0_i32, %c0_i32_0 : i32, i32
  }
  func.func @transform_3(%arg0: i32) -> (i32, i32) {
    %c0_i32 = arith.constant 0 : i32
    %c0_i32_0 = arith.constant 0 : i32
    return %arg0, %c0_i32 : i32, i32
  }
}

</mosaic_0001>

<llo_original>
// kernel: mlp_model_forward.1
$region0: #{mlp_model_forward.1}
  #allocation0 [shape = 'u32[]', space=smem, size = 0x4, offset = 0x4, fixed_abs, tag = 'smem constant byte address 0x4 - core index']
  #allocation1 [shape = 'u32[144,128]{1,0:T(1,128)}', space=vmem, size = 0x12000, scoped, tag = 'internal scratch']
  %s0 = inlined_call_operand.vmem [shape: f32[64,80], index: 0, kind: input, shape index: {}]
  %s1 = inlined_call_operand.vmem [shape: f32[168,24], index: 1, kind: input, shape index: {}]
  %s2 = inlined_call_operand.vmem [shape: f32[20,24], index: 2, kind: input, shape index: {}]
  %s3 = inlined_call_operand.vmem [shape: f32[64,4], index: 3, kind: output, shape index: {}]
  %s4 = sld [smem:[#allocation0]]
  $region22: #{mlp_model_forward.1} parent=0
    _
  %s6 = ssub.s32 1, %s4
  %s7 = scalar_select 0, %s6, %s4
  // Predicated region
  $region2: #{mlp_model_forward.1} parent=0 // pred_check
    _
  $region3: #{mlp_model_forward.1} parent=0 // pred_check_branch
    %9 = sbr.rel (0) target = $region5
  $region4: #{mlp_model_forward.1} parent=0 // pred_region
    _
  $region5: #{mlp_model_forward.1} parent=0 // pred_fallthru
    _
  // Predicated region
  $region6: #{mlp_model_forward.1} parent=0 // pred_check
    _
  $region7: #{mlp_model_forward.1} parent=0 // pred_check_branch
    %11 = sbr.rel (0) target = $region9
  $region8: #{mlp_model_forward.1} parent=0 // pred_region
    _
  $region9: #{mlp_model_forward.1} parent=0 // pred_fallthru
    _
  // Predicated region
  $region10: #{mlp_model_forward.1} parent=0 // pred_check
    _
  $region11: #{mlp_model_forward.1} parent=0 // pred_check_branch
    %13 = sbr.rel (0) target = $region13
  $region12: #{mlp_model_forward.1} parent=0 // pred_region
    _
  $region13: #{mlp_model_forward.1} parent=0 // pred_fallthru
    _
  %v14 = vld [vmem:[%s0] sm:$0xff]
  %v15 = vld [vmem:[%s0 + $0x8] sm:$0xff]
  %v16 = vld [vmem:[%s0 + $0x10] sm:$0xff]
  %v17 = vld [vmem:[%s0 + $0x18] sm:$0xff]
  %v18 = vld [vmem:[%s0 + $0x20] sm:$0xff]
  %v19 = vld [vmem:[%s0 + $0x28] sm:$0xff]
  %v20 = vld [vmem:[%s0 + $0x30] sm:$0xff]
  %v21 = vld [vmem:[%s0 + $0x38] sm:$0xff]
  %v22 = vlaneseq
  %v23 = vand.u32 %v22, 127
  %vm24 = vcmp.ge.s32.totalorder %v23, 4
  %v25 = vmul.f32 %v14, %v14
  %v26 = vmul.f32 %v15, %v15
  %v27 = vmul.f32 %v16, %v16
  %v28 = vmul.f32 %v17, %v17
  %v29 = vmul.f32 %v18, %v18
  %v30 = vmul.f32 %v19, %v19
  %v31 = vmul.f32 %v20, %v20
  %v32 = vmul.f32 %v21, %v21
  %v33 = vsel %vm24, %v25, 0.0
  %v34 = vsel %vm24, %v26, 0.0
  %v35 = vsel %vm24, %v27, 0.0
  %v36 = vsel %vm24, %v28, 0.0
  %v37 = vsel %vm24, %v29, 0.0
  %v38 = vsel %vm24, %v30, 0.0
  %v39 = vsel %vm24, %v31, 0.0
  %v40 = vsel %vm24, %v32, 0.0
  %vm41 = vcmask 654336
  %v42 = vsel %vm41, %v33, 0.0
  %43 = vadd.xlane.f32.xlu0 %v42
  %v44 = vpop.xlane.xlu0 %43
  %v45 = vsel %vm41, %v34, 0.0
  %46 = vadd.xlane.f32.xlu0 %v45
  %v47 = vpop.xlane.xlu0 %46
  %v48 = vsel %vm41, %v35, 0.0
  %49 = vadd.xlane.f32.xlu0 %v48
  %v50 = vpop.xlane.xlu0 %49
  %v51 = vsel %vm41, %v36, 0.0
  %52 = vadd.xlane.f32.xlu0 %v51
  %v53 = vpop.xlane.xlu0 %52
  %v54 = vsel %vm41, %v37, 0.0
  %55 = vadd.xlane.f32.xlu0 %v54
  %v56 = vpop.xlane.xlu0 %55
  %v57 = vsel %vm41, %v38, 0.0
  %58 = vadd.xlane.f32.xlu0 %v57
  %v59 = vpop.xlane.xlu0 %58
  %v60 = vsel %vm41, %v39, 0.0
  %61 = vadd.xlane.f32.xlu0 %v60
  %v62 = vpop.xlane.xlu0 %61
  %v63 = vsel %vm41, %v40, 0.0
  %64 = vadd.xlane.f32.xlu0 %v63
  %v65 = vpop.xlane.xlu0 %64
  %v66 = vmax.f32 %v44, 1e-24
  %v67 = vmax.f32 %v47, 1e-24
  %v68 = vmax.f32 %v50, 1e-24
  %v69 = vmax.f32 %v53, 1e-24
  %v70 = vmax.f32 %v56, 1e-24
  %v71 = vmax.f32 %v59, 1e-24
  %v72 = vmax.f32 %v62, 1e-24
  %v73 = vmax.f32 %v65, 1e-24
  %v74 = vrsqrt.pop %v66
  %v75 = vrsqrt.pop %v67
  %v76 = vrsqrt.pop %v68
  %v77 = vrsqrt.pop %v69
  %v78 = vrsqrt.pop %v70
  %v79 = vrsqrt.pop %v71
  %v80 = vrsqrt.pop %v72
  %v81 = vrsqrt.pop %v73
  %v82 = vld [vmem:[%s1] sm:$0xff]
  %v83 = vld [vmem:[%s1 + $0x8] sm:$0xff]
  %v84 = vld [vmem:[%s1 + $0x10] sm:$0xff]
  %v85 = vld [vmem:[%s1 + $0x18] sm:$0xff]
  %v86 = vld [vmem:[%s1 + $0x20] sm:$0xff]
  %v87 = vld [vmem:[%s1 + $0x28] sm:$0xff]
  %v88 = vld [vmem:[%s1 + $0x30] sm:$0xff]
  %v89 = vld [vmem:[%s1 + $0x38] sm:$0xff]
  %v90 = vld [vmem:[%s1 + $0x40] sm:$0xff]
  %v91 = vld [vmem:[%s1 + $0x48] sm:$0xff]
  %v93 = vsel %vm41, %v14, 0
  %v96 = vsel %vm41, %v15, 0
  %v99 = vsel %vm41, %v16, 0
  %v102 = vsel %vm41, %v17, 0
  %v105 = vsel %vm41, %v18, 0
  %v108 = vsel %vm41, %v19, 0
  %v111 = vsel %vm41, %v20, 0
  %v114 = vsel %vm41, %v21, 0
  %116 = vmatprep.subr.mxu0 0.0
  %117 = vmatpush1.msra.mxu0 0.0
  %118 = vmatprep.subr.mxu0 0.0
  %119 = vmatpush1.msra.mxu0 0.0
  %120 = vmatprep.subr.mxu0 0.0
  %121 = vmatpush1.msra.mxu0 0.0
  %122 = vmatprep.subr.mxu0 0.0
  %123 = vmatpush1.msra.mxu0 0.0
  %124 = vmatprep.subr.mxu0 0.0
  %125 = vmatpush1.msra.mxu0 0.0
  %126 = vmatprep.subr.mxu0 0.0
  %127 = vmatpush1.msra.mxu0 0.0
  %128 = vmatprep.subr.mxu0 0.0
  %129 = vmatpush1.msra.mxu0 %v91
  %130 = vmatprep.subr.mxu0 0.0
  %131 = vmatpush1.msra.mxu0 %v90
  %132 = vmatprep.subr.mxu0 0.0
  %133 = vmatpush1.msra.mxu0 %v89
  %134 = vmatprep.subr.mxu0 0.0
  %135 = vmatpush1.msra.mxu0 %v88
  %136 = vmatprep.subr.mxu0 0.0
  %137 = vmatpush1.msra.mxu0 %v87
  %138 = vmatprep.subr.mxu0 0.0
  %139 = vmatpush1.msra.mxu0 %v86
  %140 = vmatprep.subr.mxu0 0.0
  %141 = vmatpush1.msra.mxu0 %v85
  %142 = vmatprep.subr.mxu0 0.0
  %143 = vmatpush1.msra.mxu0 %v84
  %144 = vmatprep.subr.mxu0 0.0
  %145 = vmatpush1.msra.mxu0 %v83
  %146 = vmatprep.subr.mxu0 0.0
  %147 = vmatpush1.msra.mxu0 %v82
  %148 = vmatprep.subr.mxu0 0.0
  %149 = vmatpush2.msra.mxu0 0.0
  %150 = vmatprep.subr.mxu0 0.0
  %151 = vmatpush2.msra.mxu0 0.0
  %152 = vmatprep.subr.mxu0 0.0
  %153 = vmatpush2.msra.mxu0 0.0
  %154 = vmatprep.subr.mxu0 0.0
  %155 = vmatpush2.msra.mxu0 0.0
  %156 = vmatprep.subr.mxu0 0.0
  %157 = vmatpush2.msra.mxu0 0.0
  %158 = vmatprep.subr.mxu0 0.0
  %159 = vmatpush2.msra.mxu0 0.0
  %160 = vmatprep.subr.mxu0 0.0
  %161 = vmatpush2.msra.mxu0 0.0
  %162 = vmatprep.subr.mxu0 0.0
  %163 = vmatpush2.msra.mxu0 0.0
  %164 = vmatprep.subr.mxu0 0.0
  %165 = vmatpush2.msra.mxu0 0.0
  %166 = vmatprep.subr.mxu0 0.0
  %167 = vmatpush2.msra.mxu0 0.0
  %168 = vmatprep.subr.mxu0 0.0
  %169 = vmatpush2.msra.mxu0 0.0
  %170 = vmatprep.subr.mxu0 0.0
  %171 = vmatpush2.msra.mxu0 0.0
  %172 = vmatprep.subr.mxu0 0.0
  %173 = vmatpush2.msra.mxu0 0.0
  %174 = vmatprep.subr.mxu0 0.0
  %175 = vmatpush2.msra.mxu0 0.0
  %176 = vmatprep.subr.mxu0 0.0
  %177 = vmatpush2.msra.mxu0 0.0
  %178 = vmatprep.subr.mxu0 0.0
  %179 = vmatpush2.msra.mxu0 0.0
  %180 = vmatprep.mubr.f32.mxu0 0.0
  %181 = vmatmul.mubr.f32.gmra.mxu0 %v93
  %v182 = vpop.f32.mrf.mxu0
  %v183 = vadd.f32 0.0, %v182
  %v184 = vpop.f32.mrf.mxu0
  %185 = vmatprep.mubr.f32.mxu0 0.0
  %186 = vmatmul.mubr.f32.gmra.mxu0 %v96
  %v187 = vpop.f32.mrf.mxu0
  %v188 = vadd.f32 0.0, %v187
  %v189 = vpop.f32.mrf.mxu0
  %190 = vmatprep.mubr.f32.mxu0 0.0
  %191 = vmatmul.mubr.f32.gmra.mxu0 %v99
  %v192 = vpop.f32.mrf.mxu0
  %v193 = vadd.f32 0.0, %v192
  %v194 = vpop.f32.mrf.mxu0
  %195 = vmatprep.mubr.f32.mxu0 0.0
  %196 = vmatmul.mubr.f32.gmra.mxu0 %v102
  %v197 = vpop.f32.mrf.mxu0
  %v198 = vadd.f32 0.0, %v197
  %v199 = vpop.f32.mrf.mxu0
  %200 = vmatprep.mubr.f32.mxu0 0.0
  %201 = vmatmul.mubr.f32.gmra.mxu0 %v105
  %v202 = vpop.f32.mrf.mxu0
  %v203 = vadd.f32 0.0, %v202
  %v204 = vpop.f32.mrf.mxu0
  %205 = vmatprep.mubr.f32.mxu0 0.0
  %206 = vmatmul.mubr.f32.gmra.mxu0 %v108
  %v207 = vpop.f32.mrf.mxu0
  %v208 = vadd.f32 0.0, %v207
  %v209 = vpop.f32.mrf.mxu0
  %210 = vmatprep.mubr.f32.mxu0 0.0
  %211 = vmatmul.mubr.f32.gmra.mxu0 %v111
  %v212 = vpop.f32.mrf.mxu0
  %v213 = vadd.f32 0.0, %v212
  %v214 = vpop.f32.mrf.mxu0
  %215 = vmatprep.mubr.f32.mxu0 0.0
  %216 = vmatmul.mubr.f32.gmra.mxu0 %v114
  %v217 = vpop.f32.mrf.mxu0
  %v218 = vadd.f32 0.0, %v217
  %v219 = vpop.f32.mrf.mxu0
  %220 = vdwg.mxu0
  %vm221 = vcmp.ge.s32.totalorder %v23, 8
  %v222 = vmul.f32 %v183, %v74
  %v223 = vmul.f32 %v188, %v75
  %v224 = vmul.f32 %v193, %v76
  %v225 = vmul.f32 %v198, %v77
  %v226 = vmul.f32 %v203, %v78
  %v227 = vmul.f32 %v208, %v79
  %v228 = vmul.f32 %v213, %v80
  %v229 = vmul.f32 %v218, %v81
  %v230 = vsel %vm221, %v222, %v183
  %v231 = vsel %vm221, %v223, %v188
  %v232 = vsel %vm221, %v224, %v193
  %v233 = vsel %vm221, %v225, %v198
  %v234 = vsel %vm221, %v226, %v203
  %v235 = vsel %vm221, %v227, %v208
  %v236 = vsel %vm221, %v228, %v213
  %v237 = vsel %vm221, %v229, %v218
  %v238 = vld [vmem:[%s2] sm:$0x1]
  %v239 = vlaneseq
  %v240 = vshrl.u32 %v239, 7
  %v241 = vsub.s32 0, %v240
  %v242 = vrot.slane %v238, %v241
  %v243 = vadd.f32 %v230, %v242
  %v244 = vadd.f32 %v231, %v242
  %v245 = vadd.f32 %v232, %v242
  %v246 = vadd.f32 %v233, %v242
  %v247 = vadd.f32 %v234, %v242
  %v248 = vadd.f32 %v235, %v242
  %v249 = vadd.f32 %v236, %v242
  %v250 = vadd.f32 %v237, %v242
  %v251 = vmax.f32 %v243, 0.0
  %v252 = vmax.f32 %v244, 0.0
  %v253 = vmax.f32 %v245, 0.0
  %v254 = vmax.f32 %v246, 0.0
  %v255 = vmax.f32 %v247, 0.0
  %v256 = vmax.f32 %v248, 0.0
  %v257 = vmax.f32 %v249, 0.0
  %v258 = vmax.f32 %v250, 0.0
  %vm259 = vcmask 195584
  %v260 = vsel %vm259, %v251, 0.0
  %v261 = vsel %vm259, %v252, 0.0
  %v262 = vadd.f32 %v260, %v261
  %v263 = vsel %vm259, %v253, 0.0
  %v264 = vadd.f32 %v262, %v263
  %v265 = vsel %vm259, %v254, 0.0
  %v266 = vadd.f32 %v264, %v265
  %v267 = vsel %vm259, %v255, 0.0
  %v268 = vadd.f32 %v266, %v267
  %v269 = vsel %vm259, %v256, 0.0
  %v270 = vadd.f32 %v268, %v269
  %v271 = vsel %vm259, %v257, 0.0
  %v272 = vadd.f32 %v270, %v271
  %v273 = vsel %vm259, %v258, 0.0
  %v274 = vadd.f32 %v272, %v273
  %v275 = vrot.slane %v274, 4
  %v276 = vadd.f32 %v274, %v275
  %v277 = vrot.slane %v276, 2
  %v278 = vadd.f32 %v276, %v277
  %v279 = vrot.slane %v278, 1
  %v280 = vadd.f32 %v278, %v279
  %v281 = vmul.f32 %v251, %v251
  %v282 = vmul.f32 %v252, %v252
  %v283 = vmul.f32 %v253, %v253
  %v284 = vmul.f32 %v254, %v254
  %v285 = vmul.f32 %v255, %v255
  %v286 = vmul.f32 %v256, %v256
  %v287 = vmul.f32 %v257, %v257
  %v288 = vmul.f32 %v258, %v258
  %v289 = vsel %vm259, %v281, 0.0
  %v290 = vsel %vm259, %v282, 0.0
  %v291 = vadd.f32 %v289, %v290
  %v292 = vsel %vm259, %v283, 0.0
  %v293 = vadd.f32 %v291, %v292
  %v294 = vsel %vm259, %v284, 0.0
  %v295 = vadd.f32 %v293, %v294
  %v296 = vsel %vm259, %v285, 0.0
  %v297 = vadd.f32 %v295, %v296
  %v298 = vsel %vm259, %v286, 0.0
  %v299 = vadd.f32 %v297, %v298
  %v300 = vsel %vm259, %v287, 0.0
  %v301 = vadd.f32 %v299, %v300
  %v302 = vsel %vm259, %v288, 0.0
  %v303 = vadd.f32 %v301, %v302
  %v304 = vrot.slane %v303, 4
  %v305 = vadd.f32 %v303, %v304
  %v306 = vrot.slane %v305, 2
  %v307 = vadd.f32 %v305, %v306
  %v308 = vrot.slane %v307, 1
  %v309 = vadd.f32 %v307, %v308
  %v310 = vmul.f32 %v280, 0.015625
  %v311 = vmul.f32 %v309, 0.015625
  %v312 = vmul.f32 %v310, %v310
  %v313 = vsub.f32 %v311, %v312
  %v314 = vmax.f32 %v313, 0.0
  %v315 = vld [vmem:[%s2 + $0x1] sm:$0x1]
  %v316 = vld [vmem:[%s2 + $0x2] sm:$0x1]
  %v317 = vadd.f32 %v314, 1e-05
  %v318 = vrsqrt.pop %v317
  %v319 = vmul.f32 %v315, %v318
  %v320 = vmul.f32 %v310, %v319
  %v321 = vsub.f32 %v316, %v320
  %v322 = vlaneseq
  %v323 = vshrl.u32 %v322, 7
  %v324 = vsub.s32 0, %v323
  %v325 = vrot.slane %v319, %v324
  %v326 = vmul.f32 %v251, %v325
  %v327 = vmul.f32 %v252, %v325
  %v328 = vmul.f32 %v253, %v325
  %v329 = vmul.f32 %v254, %v325
  %v330 = vmul.f32 %v255, %v325
  %v331 = vmul.f32 %v256, %v325
  %v332 = vmul.f32 %v257, %v325
  %v333 = vmul.f32 %v258, %v325
  %v334 = vlaneseq
  %v335 = vshrl.u32 %v334, 7
  %v336 = vsub.s32 0, %v335
  %v337 = vrot.slane %v321, %v336
  %v338 = vadd.f32 %v326, %v337
  %v339 = vadd.f32 %v327, %v337
  %v340 = vadd.f32 %v328, %v337
  %v341 = vadd.f32 %v329, %v337
  %v342 = vadd.f32 %v330, %v337
  %v343 = vadd.f32 %v331, %v337
  %v344 = vadd.f32 %v332, %v337
  %v345 = vadd.f32 %v333, %v337
  %v346 = vld [vmem:[%s1 + $0x50] sm:$0xff]
  %v347 = vld [vmem:[%s1 + $0x58] sm:$0xff]
  %v348 = vld [vmem:[%s1 + $0x60] sm:$0xff]
  %v349 = vld [vmem:[%s2 + $0x3] sm:$0x1]
  %v350 = vlaneseq
  %v351 = vshrl.u32 %v350, 7
  %v352 = vsub.s32 0, %v351
  %v353 = vrot.slane %v349, %v352
  %v355 = vsel %vm259, %v338, 0
  %v358 = vsel %vm259, %v339, 0
  %v361 = vsel %vm259, %v340, 0
  %v364 = vsel %vm259, %v341, 0
  %v367 = vsel %vm259, %v342, 0
  %v370 = vsel %vm259, %v343, 0
  %v373 = vsel %vm259, %v344, 0
  %v376 = vsel %vm259, %v345, 0
  %378 = vmatprep.subr.mxu0 0.0
  %379 = vmatpush1.msra.mxu0 0.0
  %380 = vmatprep.subr.mxu0 0.0
  %381 = vmatpush1.msra.mxu0 0.0
  %382 = vmatprep.subr.mxu0 0.0
  %383 = vmatpush1.msra.mxu0 0.0
  %384 = vmatprep.subr.mxu0 0.0
  %385 = vmatpush1.msra.mxu0 0.0
  %386 = vmatprep.subr.mxu0 0.0
  %387 = vmatpush1.msra.mxu0 0.0
  %388 = vmatprep.subr.mxu0 0.0
  %389 = vmatpush1.msra.mxu0 0.0
  %390 = vmatprep.subr.mxu0 0.0
  %391 = vmatpush1.msra.mxu0 0.0
  %392 = vmatprep.subr.mxu0 0.0
  %393 = vmatpush1.msra.mxu0 0.0
  %394 = vmatprep.subr.mxu0 0.0
  %395 = vmatpush1.msra.mxu0 0.0
  %396 = vmatprep.subr.mxu0 0.0
  %397 = vmatpush1.msra.mxu0 0.0
  %398 = vmatprep.subr.mxu0 0.0
  %399 = vmatpush1.msra.mxu0 0.0
  %400 = vmatprep.subr.mxu0 0.0
  %401 = vmatpush1.msra.mxu0 0.0
  %402 = vmatprep.subr.mxu0 0.0
  %403 = vmatpush1.msra.mxu0 0.0
  %404 = vmatprep.subr.mxu0 0.0
  %405 = vmatpush1.msra.mxu0 %v348
  %406 = vmatprep.subr.mxu0 0.0
  %407 = vmatpush1.msra.mxu0 %v347
  %408 = vmatprep.subr.mxu0 0.0
  %409 = vmatpush1.msra.mxu0 %v346
  %410 = vmatprep.subr.mxu0 0.0
  %411 = vmatpush2.msra.mxu0 0.0
  %412 = vmatprep.subr.mxu0 0.0
  %413 = vmatpush2.msra.mxu0 0.0
  %414 = vmatprep.subr.mxu0 0.0
  %415 = vmatpush2.msra.mxu0 0.0
  %416 = vmatprep.subr.mxu0 0.0
  %417 = vmatpush2.msra.mxu0 0.0
  %418 = vmatprep.subr.mxu0 0.0
  %419 = vmatpush2.msra.mxu0 0.0
  %420 = vmatprep.subr.mxu0 0.0
  %421 = vmatpush2.msra.mxu0 0.0
  %422 = vmatprep.subr.mxu0 0.0
  %423 = vmatpush2.msra.mxu0 0.0
  %424 = vmatprep.subr.mxu0 0.0
  %425 = vmatpush2.msra.mxu0 0.0
  %426 = vmatprep.subr.mxu0 0.0
  %427 = vmatpush2.msra.mxu0 0.0
  %428 = vmatprep.subr.mxu0 0.0
  %429 = vmatpush2.msra.mxu0 0.0
  %430 = vmatprep.subr.mxu0 0.0
  %431 = vmatpush2.msra.mxu0 0.0
  %432 = vmatprep.subr.mxu0 0.0
  %433 = vmatpush2.msra.mxu0 0.0
  %434 = vmatprep.subr.mxu0 0.0
  %435 = vmatpush2.msra.mxu0 0.0
  %436 = vmatprep.subr.mxu0 0.0
  %437 = vmatpush2.msra.mxu0 0.0
  %438 = vmatprep.subr.mxu0 0.0
  %439 = vmatpush2.msra.mxu0 0.0
  %440 = vmatprep.subr.mxu0 0.0
  %441 = vmatpush2.msra.mxu0 0.0
  %442 = vmatprep.mubr.f32.mxu0 0.0
  %443 = vmatmul.mubr.f32.gmra.mxu0 %v355
  %v444 = vpop.f32.mrf.mxu0
  %v445 = vadd.f32 %v353, %v444
  %v446 = vpop.f32.mrf.mxu0
  %447 = vmatprep.mubr.f32.mxu0 0.0
  %448 = vmatmul.mubr.f32.gmra.mxu0 %v358
  %v449 = vpop.f32.mrf.mxu0
  %v450 = vadd.f32 %v353, %v449
  %v451 = vpop.f32.mrf.mxu0
  %452 = vmatprep.mubr.f32.mxu0 0.0
  %453 = vmatmul.mubr.f32.gmra.mxu0 %v361
  %v454 = vpop.f32.mrf.mxu0
  %v455 = vadd.f32 %v353, %v454
  %v456 = vpop.f32.mrf.mxu0
  %457 = vmatprep.mubr.f32.mxu0 0.0
  %458 = vmatmul.mubr.f32.gmra.mxu0 %v364
  %v459 = vpop.f32.mrf.mxu0
  %v460 = vadd.f32 %v353, %v459
  %v461 = vpop.f32.mrf.mxu0
  %462 = vmatprep.mubr.f32.mxu0 0.0
  %463 = vmatmul.mubr.f32.gmra.mxu0 %v367
  %v464 = vpop.f32.mrf.mxu0
  %v465 = vadd.f32 %v353, %v464
  %v466 = vpop.f32.mrf.mxu0
  %467 = vmatprep.mubr.f32.mxu0 0.0
  %468 = vmatmul.mubr.f32.gmra.mxu0 %v370
  %v469 = vpop.f32.mrf.mxu0
  %v470 = vadd.f32 %v353, %v469
  %v471 = vpop.f32.mrf.mxu0
  %472 = vmatprep.mubr.f32.mxu0 0.0
  %473 = vmatmul.mubr.f32.gmra.mxu0 %v373
  %v474 = vpop.f32.mrf.mxu0
  %v475 = vadd.f32 %v353, %v474
  %v476 = vpop.f32.mrf.mxu0
  %477 = vmatprep.mubr.f32.mxu0 0.0
  %478 = vmatmul.mubr.f32.gmra.mxu0 %v376
  %v479 = vpop.f32.mrf.mxu0
  %v480 = vadd.f32 %v353, %v479
  %v481 = vpop.f32.mrf.mxu0
  %482 = vdwg.mxu0
  %v483 = vmax.f32 %v445, 0.0
  %v484 = vmax.f32 %v450, 0.0
  %v485 = vmax.f32 %v455, 0.0
  %v486 = vmax.f32 %v460, 0.0
  %v487 = vmax.f32 %v465, 0.0
  %v488 = vmax.f32 %v470, 0.0
  %v489 = vmax.f32 %v475, 0.0
  %v490 = vmax.f32 %v480, 0.0
  %vm491 = vcmask 130048
  %v492 = vsel %vm491, %v483, 0.0
  %v493 = vsel %vm491, %v484, 0.0
  %v494 = vadd.f32 %v492, %v493
  %v495 = vsel %vm491, %v485, 0.0
  %v496 = vadd.f32 %v494, %v495
  %v497 = vsel %vm491, %v486, 0.0
  %v498 = vadd.f32 %v496, %v497
  %v499 = vsel %vm491, %v487, 0.0
  %v500 = vadd.f32 %v498, %v499
  %v501 = vsel %vm491, %v488, 0.0
  %v502 = vadd.f32 %v500, %v501
  %v503 = vsel %vm491, %v489, 0.0
  %v504 = vadd.f32 %v502, %v503
  %v505 = vsel %vm491, %v490, 0.0
  %v506 = vadd.f32 %v504, %v505
  %v507 = vrot.slane %v506, 4
  %v508 = vadd.f32 %v506, %v507
  %v509 = vrot.slane %v508, 2
  %v510 = vadd.f32 %v508, %v509
  %v511 = vrot.slane %v510, 1
  %v512 = vadd.f32 %v510, %v511
  %v513 = vmul.f32 %v483, %v483
  %v514 = vmul.f32 %v484, %v484
  %v515 = vmul.f32 %v485, %v485
  %v516 = vmul.f32 %v486, %v486
  %v517 = vmul.f32 %v487, %v487
  %v518 = vmul.f32 %v488, %v488
  %v519 = vmul.f32 %v489, %v489
  %v520 = vmul.f32 %v490, %v490
  %v521 = vsel %vm491, %v513, 0.0
  %v522 = vsel %vm491, %v514, 0.0
  %v523 = vadd.f32 %v521, %v522
  %v524 = vsel %vm491, %v515, 0.0
  %v525 = vadd.f32 %v523, %v524
  %v526 = vsel %vm491, %v516, 0.0
  %v527 = vadd.f32 %v525, %v526
  %v528 = vsel %vm491, %v517, 0.0
  %v529 = vadd.f32 %v527, %v528
  %v530 = vsel %vm491, %v518, 0.0
  %v531 = vadd.f32 %v529, %v530
  %v532 = vsel %vm491, %v519, 0.0
  %v533 = vadd.f32 %v531, %v532
  %v534 = vsel %vm491, %v520, 0.0
  %v535 = vadd.f32 %v533, %v534
  %v536 = vrot.slane %v535, 4
  %v537 = vadd.f32 %v535, %v536
  %v538 = vrot.slane %v537, 2
  %v539 = vadd.f32 %v537, %v538
  %v540 = vrot.slane %v539, 1
  %v541 = vadd.f32 %v539, %v540
  %v542 = vmul.f32 %v512, 0.015625
  %v543 = vmul.f32 %v541, 0.015625
  %v544 = vmul.f32 %v542, %v542
  %v545 = vsub.f32 %v543, %v544
  %v546 = vmax.f32 %v545, 0.0
  %v547 = vld [vmem:[%s2 + $0x4] sm:$0x1]
  %v548 = vld [vmem:[%s2 + $0x5] sm:$0x1]
  %v549 = vadd.f32 %v546, 1e-05
  %v550 = vrsqrt.pop %v549
  %v551 = vmul.f32 %v547, %v550
  %v552 = vmul.f32 %v542, %v551
  %v553 = vsub.f32 %v548, %v552
  %v554 = vlaneseq
  %v555 = vshrl.u32 %v554, 7
  %v556 = vsub.s32 0, %v555
  %v557 = vrot.slane %v551, %v556
  %v558 = vmul.f32 %v483, %v557
  %v559 = vmul.f32 %v484, %v557
  %v560 = vmul.f32 %v485, %v557
  %v561 = vmul.f32 %v486, %v557
  %v562 = vmul.f32 %v487, %v557
  %v563 = vmul.f32 %v488, %v557
  %v564 = vmul.f32 %v489, %v557
  %v565 = vmul.f32 %v490, %v557
  %v566 = vlaneseq
  %v567 = vshrl.u32 %v566, 7
  %v568 = vsub.s32 0, %v567
  %v569 = vrot.slane %v553, %v568
  %v570 = vadd.f32 %v558, %v569
  %v571 = vadd.f32 %v559, %v569
  %v572 = vadd.f32 %v560, %v569
  %v573 = vadd.f32 %v561, %v569
  %v574 = vadd.f32 %v562, %v569
  %v575 = vadd.f32 %v563, %v569
  %v576 = vadd.f32 %v564, %v569
  %v577 = vadd.f32 %v565, %v569
  %v578 = vld [vmem:[%s1 + $0x68] sm:$0xff]
  %v579 = vld [vmem:[%s1 + $0x70] sm:$0xff]
  %v580 = vld [vmem:[%s2 + $0x6] sm:$0x1]
  %v581 = vlaneseq
  %v582 = vshrl.u32 %v581, 7
  %v583 = vsub.s32 0, %v582
  %v584 = vrot.slane %v580, %v583
  %v586 = vsel %vm491, %v570, 0
  %v589 = vsel %vm491, %v571, 0
  %v592 = vsel %vm491, %v572, 0
  %v595 = vsel %vm491, %v573, 0
  %v598 = vsel %vm491, %v574, 0
  %v601 = vsel %vm491, %v575, 0
  %v604 = vsel %vm491, %v576, 0
  %v607 = vsel %vm491, %v577, 0
  %609 = vmatprep.subr.mxu0 0.0
  %610 = vmatpush1.msra.mxu0 0.0
  %611 = vmatprep.subr.mxu0 0.0
  %612 = vmatpush1.msra.mxu0 0.0
  %613 = vmatprep.subr.mxu0 0.0
  %614 = vmatpush1.msra.mxu0 0.0
  %615 = vmatprep.subr.mxu0 0.0
  %616 = vmatpush1.msra.mxu0 0.0
  %617 = vmatprep.subr.mxu0 0.0
  %618 = vmatpush1.msra.mxu0 0.0
  %619 = vmatprep.subr.mxu0 0.0
  %620 = vmatpush1.msra.mxu0 0.0
  %621 = vmatprep.subr.mxu0 0.0
  %622 = vmatpush1.msra.mxu0 0.0
  %623 = vmatprep.subr.mxu0 0.0
  %624 = vmatpush1.msra.mxu0 0.0
  %625 = vmatprep.subr.mxu0 0.0
  %626 = vmatpush1.msra.mxu0 0.0
  %627 = vmatprep.subr.mxu0 0.0
  %628 = vmatpush1.msra.mxu0 0.0
  %629 = vmatprep.subr.mxu0 0.0
  %630 = vmatpush1.msra.mxu0 0.0
  %631 = vmatprep.subr.mxu0 0.0
  %632 = vmatpush1.msra.mxu0 0.0
  %633 = vmatprep.subr.mxu0 0.0
  %634 = vmatpush1.msra.mxu0 0.0
  %635 = vmatprep.subr.mxu0 0.0
  %636 = vmatpush1.msra.mxu0 0.0
  %637 = vmatprep.subr.mxu0 0.0
  %638 = vmatpush1.msra.mxu0 %v579
  %639 = vmatprep.subr.mxu0 0.0
  %640 = vmatpush1.msra.mxu0 %v578
  %641 = vmatprep.subr.mxu0 0.0
  %642 = vmatpush2.msra.mxu0 0.0
  %643 = vmatprep.subr.mxu0 0.0
  %644 = vmatpush2.msra.mxu0 0.0
  %645 = vmatprep.subr.mxu0 0.0
  %646 = vmatpush2.msra.mxu0 0.0
  %647 = vmatprep.subr.mxu0 0.0
  %648 = vmatpush2.msra.mxu0 0.0
  %649 = vmatprep.subr.mxu0 0.0
  %650 = vmatpush2.msra.mxu0 0.0
  %651 = vmatprep.subr.mxu0 0.0
  %652 = vmatpush2.msra.mxu0 0.0
  %653 = vmatprep.subr.mxu0 0.0
  %654 = vmatpush2.msra.mxu0 0.0
  %655 = vmatprep.subr.mxu0 0.0
  %656 = vmatpush2.msra.mxu0 0.0
  %657 = vmatprep.subr.mxu0 0.0
  %658 = vmatpush2.msra.mxu0 0.0
  %659 = vmatprep.subr.mxu0 0.0
  %660 = vmatpush2.msra.mxu0 0.0
  %661 = vmatprep.subr.mxu0 0.0
  %662 = vmatpush2.msra.mxu0 0.0
  %663 = vmatprep.subr.mxu0 0.0
  %664 = vmatpush2.msra.mxu0 0.0
  %665 = vmatprep.subr.mxu0 0.0
  %666 = vmatpush2.msra.mxu0 0.0
  %667 = vmatprep.subr.mxu0 0.0
  %668 = vmatpush2.msra.mxu0 0.0
  %669 = vmatprep.subr.mxu0 0.0
  %670 = vmatpush2.msra.mxu0 0.0
  %671 = vmatprep.subr.mxu0 0.0
  %672 = vmatpush2.msra.mxu0 0.0
  %673 = vmatprep.mubr.f32.mxu0 0.0
  %674 = vmatmul.mubr.f32.gmra.mxu0 %v586
  %v675 = vpop.f32.mrf.mxu0
  %v676 = vadd.f32 %v584, %v675
  %v677 = vpop.f32.mrf.mxu0
  %678 = vmatprep.mubr.f32.mxu0 0.0
  %679 = vmatmul.mubr.f32.gmra.mxu0 %v589
  %v680 = vpop.f32.mrf.mxu0
  %v681 = vadd.f32 %v584, %v680
  %v682 = vpop.f32.mrf.mxu0
  %683 = vmatprep.mubr.f32.mxu0 0.0
  %684 = vmatmul.mubr.f32.gmra.mxu0 %v592
  %v685 = vpop.f32.mrf.mxu0
  %v686 = vadd.f32 %v584, %v685
  %v687 = vpop.f32.mrf.mxu0
  %688 = vmatprep.mubr.f32.mxu0 0.0
  %689 = vmatmul.mubr.f32.gmra.mxu0 %v595
  %v690 = vpop.f32.mrf.mxu0
  %v691 = vadd.f32 %v584, %v690
  %v692 = vpop.f32.mrf.mxu0
  %693 = vmatprep.mubr.f32.mxu0 0.0
  %694 = vmatmul.mubr.f32.gmra.mxu0 %v598
  %v695 = vpop.f32.mrf.mxu0
  %v696 = vadd.f32 %v584, %v695
  %v697 = vpop.f32.mrf.mxu0
  %698 = vmatprep.mubr.f32.mxu0 0.0
  %699 = vmatmul.mubr.f32.gmra.mxu0 %v601
  %v700 = vpop.f32.mrf.mxu0
  %v701 = vadd.f32 %v584, %v700
  %v702 = vpop.f32.mrf.mxu0
  %703 = vmatprep.mubr.f32.mxu0 0.0
  %704 = vmatmul.mubr.f32.gmra.mxu0 %v604
  %v705 = vpop.f32.mrf.mxu0
  %v706 = vadd.f32 %v584, %v705
  %v707 = vpop.f32.mrf.mxu0
  %708 = vmatprep.mubr.f32.mxu0 0.0
  %709 = vmatmul.mubr.f32.gmra.mxu0 %v607
  %v710 = vpop.f32.mrf.mxu0
  %v711 = vadd.f32 %v584, %v710
  %v712 = vpop.f32.mrf.mxu0
  %713 = vdwg.mxu0
  %v714 = vmax.f32 %v676, 0.0
  %v715 = vmax.f32 %v681, 0.0
  %v716 = vmax.f32 %v686, 0.0
  %v717 = vmax.f32 %v691, 0.0
  %v718 = vmax.f32 %v696, 0.0
  %v719 = vmax.f32 %v701, 0.0
  %v720 = vmax.f32 %v706, 0.0
  %v721 = vmax.f32 %v711, 0.0
  %vm722 = vcmask 97280
  %v723 = vsel %vm722, %v714, 0.0
  %v724 = vsel %vm722, %v715, 0.0
  %v725 = vadd.f32 %v723, %v724
  %v726 = vsel %vm722, %v716, 0.0
  %v727 = vadd.f32 %v725, %v726
  %v728 = vsel %vm722, %v717, 0.0
  %v729 = vadd.f32 %v727, %v728
  %v730 = vsel %vm722, %v718, 0.0
  %v731 = vadd.f32 %v729, %v730
  %v732 = vsel %vm722, %v719, 0.0
  %v733 = vadd.f32 %v731, %v732
  %v734 = vsel %vm722, %v720, 0.0
  %v735 = vadd.f32 %v733, %v734
  %v736 = vsel %vm722, %v721, 0.0
  %v737 = vadd.f32 %v735, %v736
  %v738 = vrot.slane %v737, 4
  %v739 = vadd.f32 %v737, %v738
  %v740 = vrot.slane %v739, 2
  %v741 = vadd.f32 %v739, %v740
  %v742 = vrot.slane %v741, 1
  %v743 = vadd.f32 %v741, %v742
  %v744 = vmul.f32 %v714, %v714
  %v745 = vmul.f32 %v715, %v715
  %v746 = vmul.f32 %v716, %v716
  %v747 = vmul.f32 %v717, %v717
  %v748 = vmul.f32 %v718, %v718
  %v749 = vmul.f32 %v719, %v719
  %v750 = vmul.f32 %v720, %v720
  %v751 = vmul.f32 %v721, %v721
  %v752 = vsel %vm722, %v744, 0.0
  %v753 = vsel %vm722, %v745, 0.0
  %v754 = vadd.f32 %v752, %v753
  %v755 = vsel %vm722, %v746, 0.0
  %v756 = vadd.f32 %v754, %v755
  %v757 = vsel %vm722, %v747, 0.0
  %v758 = vadd.f32 %v756, %v757
  %v759 = vsel %vm722, %v748, 0.0
  %v760 = vadd.f32 %v758, %v759
  %v761 = vsel %vm722, %v749, 0.0
  %v762 = vadd.f32 %v760, %v761
  %v763 = vsel %vm722, %v750, 0.0
  %v764 = vadd.f32 %v762, %v763
  %v765 = vsel %vm722, %v751, 0.0
  %v766 = vadd.f32 %v764, %v765
  %v767 = vrot.slane %v766, 4
  %v768 = vadd.f32 %v766, %v767
  %v769 = vrot.slane %v768, 2
  %v770 = vadd.f32 %v768, %v769
  %v771 = vrot.slane %v770, 1
  %v772 = vadd.f32 %v770, %v771
  %v773 = vmul.f32 %v743, 0.015625
  %v774 = vmul.f32 %v772, 0.015625
  %v775 = vmul.f32 %v773, %v773
  %v776 = vsub.f32 %v774, %v775
  %v777 = vmax.f32 %v776, 0.0
  %v778 = vld [vmem:[%s2 + $0x7] sm:$0x1]
  %v779 = vld [vmem:[%s2 + $0x8] sm:$0x1]
  %v780 = vadd.f32 %v777, 1e-05
  %v781 = vrsqrt.pop %v780
  %v782 = vmul.f32 %v778, %v781
  %v783 = vmul.f32 %v773, %v782
  %v784 = vsub.f32 %v779, %v783
  %v785 = vlaneseq
  %v786 = vshrl.u32 %v785, 7
  %v787 = vsub.s32 0, %v786
  %v788 = vrot.slane %v782, %v787
  %v789 = vmul.f32 %v714, %v788
  %v790 = vmul.f32 %v715, %v788
  %v791 = vmul.f32 %v716, %v788
  %v792 = vmul.f32 %v717, %v788
  %v793 = vmul.f32 %v718, %v788
  %v794 = vmul.f32 %v719, %v788
  %v795 = vmul.f32 %v720, %v788
  %v796 = vmul.f32 %v721, %v788
  %v797 = vlaneseq
  %v798 = vshrl.u32 %v797, 7
  %v799 = vsub.s32 0, %v798
  %v800 = vrot.slane %v784, %v799
  %v801 = vadd.f32 %v789, %v800
  %v802 = vadd.f32 %v790, %v800
  %v803 = vadd.f32 %v791, %v800
  %v804 = vadd.f32 %v792, %v800
  %v805 = vadd.f32 %v793, %v800
  %v806 = vadd.f32 %v794, %v800
  %v807 = vadd.f32 %v795, %v800
  %v808 = vadd.f32 %v796, %v800
  %v809 = vld [vmem:[%s1 + $0x78] sm:$0xff]
  %v810 = vld [vmem:[%s1 + $0x80] sm:$0xf]
  %v811 = vld [vmem:[%s2 + $0x9] sm:$0x1]
  %v812 = vlaneseq
  %v813 = vshrl.u32 %v812, 7
  %v814 = vsub.s32 0, %v813
  %v815 = vrot.slane %v811, %v814
  %v817 = vsel %vm722, %v801, 0
  %v820 = vsel %vm722, %v802, 0
  %v823 = vsel %vm722, %v803, 0
  %v826 = vsel %vm722, %v804, 0
  %v829 = vsel %vm722, %v805, 0
  %v832 = vsel %vm722, %v806, 0
  %v835 = vsel %vm722, %v807, 0
  %v838 = vsel %vm722, %v808, 0
  %vm840 = vcmask 1043456
  %v842 = vsel %vm840, %v810, 0
  %844 = vmatprep.subr.mxu0 0.0
  %845 = vmatpush1.msra.mxu0 0.0
  %846 = vmatprep.subr.mxu0 0.0
  %847 = vmatpush1.msra.mxu0 0.0
  %848 = vmatprep.subr.mxu0 0.0
  %849 = vmatpush1.msra.mxu0 0.0
  %850 = vmatprep.subr.mxu0 0.0
  %851 = vmatpush1.msra.mxu0 0.0
  %852 = vmatprep.subr.mxu0 0.0
  %853 = vmatpush1.msra.mxu0 0.0
  %854 = vmatprep.subr.mxu0 0.0
  %855 = vmatpush1.msra.mxu0 0.0
  %856 = vmatprep.subr.mxu0 0.0
  %857 = vmatpush1.msra.mxu0 0.0
  %858 = vmatprep.subr.mxu0 0.0
  %859 = vmatpush1.msra.mxu0 0.0
  %860 = vmatprep.subr.mxu0 0.0
  %861 = vmatpush1.msra.mxu0 0.0
  %862 = vmatprep.subr.mxu0 0.0
  %863 = vmatpush1.msra.mxu0 0.0
  %864 = vmatprep.subr.mxu0 0.0
  %865 = vmatpush1.msra.mxu0 0.0
  %866 = vmatprep.subr.mxu0 0.0
  %867 = vmatpush1.msra.mxu0 0.0
  %868 = vmatprep.subr.mxu0 0.0
  %869 = vmatpush1.msra.mxu0 0.0
  %870 = vmatprep.subr.mxu0 0.0
  %871 = vmatpush1.msra.mxu0 0.0
  %872 = vmatprep.subr.mxu0 0.0
  %873 = vmatpush1.msra.mxu0 %v842
  %874 = vmatprep.subr.mxu0 0.0
  %875 = vmatpush1.msra.mxu0 %v809
  %876 = vmatprep.subr.mxu0 0.0
  %877 = vmatpush2.msra.mxu0 0.0
  %878 = vmatprep.subr.mxu0 0.0
  %879 = vmatpush2.msra.mxu0 0.0
  %880 = vmatprep.subr.mxu0 0.0
  %881 = vmatpush2.msra.mxu0 0.0
  %882 = vmatprep.subr.mxu0 0.0
  %883 = vmatpush2.msra.mxu0 0.0
  %884 = vmatprep.subr.mxu0 0.0
  %885 = vmatpush2.msra.mxu0 0.0
  %886 = vmatprep.subr.mxu0 0.0
  %887 = vmatpush2.msra.mxu0 0.0
  %888 = vmatprep.subr.mxu0 0.0
  %889 = vmatpush2.msra.mxu0 0.0
  %890 = vmatprep.subr.mxu0 0.0
  %891 = vmatpush2.msra.mxu0 0.0
  %892 = vmatprep.subr.mxu0 0.0
  %893 = vmatpush2.msra.mxu0 0.0
  %894 = vmatprep.subr.mxu0 0.0
  %895 = vmatpush2.msra.mxu0 0.0
  %896 = vmatprep.subr.mxu0 0.0
  %897 = vmatpush2.msra.mxu0 0.0
  %898 = vmatprep.subr.mxu0 0.0
  %899 = vmatpush2.msra.mxu0 0.0
  %900 = vmatprep.subr.mxu0 0.0
  %901 = vmatpush2.msra.mxu0 0.0
  %902 = vmatprep.subr.mxu0 0.0
  %903 = vmatpush2.msra.mxu0 0.0
  %904 = vmatprep.subr.mxu0 0.0
  %905 = vmatpush2.msra.mxu0 0.0
  %906 = vmatprep.subr.mxu0 0.0
  %907 = vmatpush2.msra.mxu0 0.0
  %908 = vmatprep.mubr.f32.mxu0 0.0
  %909 = vmatmul.mubr.f32.gmra.mxu0 %v817
  %v910 = vpop.f32.mrf.mxu0
  %v911 = vadd.f32 %v815, %v910
  %v912 = vpop.f32.mrf.mxu0
  %913 = vmatprep.mubr.f32.mxu0 0.0
  %914 = vmatmul.mubr.f32.gmra.mxu0 %v820
  %v915 = vpop.f32.mrf.mxu0
  %v916 = vadd.f32 %v815, %v915
  %v917 = vpop.f32.mrf.mxu0
  %918 = vmatprep.mubr.f32.mxu0 0.0
  %919 = vmatmul.mubr.f32.gmra.mxu0 %v823
  %v920 = vpop.f32.mrf.mxu0
  %v921 = vadd.f32 %v815, %v920
  %v922 = vpop.f32.mrf.mxu0
  %923 = vmatprep.mubr.f32.mxu0 0.0
  %924 = vmatmul.mubr.f32.gmra.mxu0 %v826
  %v925 = vpop.f32.mrf.mxu0
  %v926 = vadd.f32 %v815, %v925
  %v927 = vpop.f32.mrf.mxu0
  %928 = vmatprep.mubr.f32.mxu0 0.0
  %929 = vmatmul.mubr.f32.gmra.mxu0 %v829
  %v930 = vpop.f32.mrf.mxu0
  %v931 = vadd.f32 %v815, %v930
  %v932 = vpop.f32.mrf.mxu0
  %933 = vmatprep.mubr.f32.mxu0 0.0
  %934 = vmatmul.mubr.f32.gmra.mxu0 %v832
  %v935 = vpop.f32.mrf.mxu0
  %v936 = vadd.f32 %v815, %v935
  %v937 = vpop.f32.mrf.mxu0
  %938 = vmatprep.mubr.f32.mxu0 0.0
  %939 = vmatmul.mubr.f32.gmra.mxu0 %v835
  %v940 = vpop.f32.mrf.mxu0
  %v941 = vadd.f32 %v815, %v940
  %v942 = vpop.f32.mrf.mxu0
  %943 = vmatprep.mubr.f32.mxu0 0.0
  %944 = vmatmul.mubr.f32.gmra.mxu0 %v838
  %v945 = vpop.f32.mrf.mxu0
  %v946 = vadd.f32 %v815, %v945
  %v947 = vpop.f32.mrf.mxu0
  %948 = vdwg.mxu0
  %v949 = vld [vmem:[%s1 + $0x88] sm:$0xff]
  %v950 = vld [vmem:[%s2 + $0xa] sm:$0x1]
  %v951 = vlaneseq
  %v952 = vshrl.u32 %v951, 7
  %v953 = vsub.s32 0, %v952
  %v954 = vrot.slane %v950, %v953
  %vm955 = vcmask 64512
  %v957 = vsel %vm955, %v911, 0
  %v960 = vsel %vm955, %v916, 0
  %v963 = vsel %vm955, %v921, 0
  %v966 = vsel %vm955, %v926, 0
  %v969 = vsel %vm955, %v931, 0
  %v972 = vsel %vm955, %v936, 0
  %v975 = vsel %vm955, %v941, 0
  %v978 = vsel %vm955, %v946, 0
  %980 = vmatprep.subr.mxu0 0.0
  %981 = vmatpush1.msra.mxu0 0.0
  %982 = vmatprep.subr.mxu0 0.0
  %983 = vmatpush1.msra.mxu0 0.0
  %984 = vmatprep.subr.mxu0 0.0
  %985 = vmatpush1.msra.mxu0 0.0
  %986 = vmatprep.subr.mxu0 0.0
  %987 = vmatpush1.msra.mxu0 0.0
  %988 = vmatprep.subr.mxu0 0.0
  %989 = vmatpush1.msra.mxu0 0.0
  %990 = vmatprep.subr.mxu0 0.0
  %991 = vmatpush1.msra.mxu0 0.0
  %992 = vmatprep.subr.mxu0 0.0
  %993 = vmatpush1.msra.mxu0 0.0
  %994 = vmatprep.subr.mxu0 0.0
  %995 = vmatpush1.msra.mxu0 0.0
  %996 = vmatprep.subr.mxu0 0.0
  %997 = vmatpush1.msra.mxu0 0.0
  %998 = vmatprep.subr.mxu0 0.0
  %999 = vmatpush1.msra.mxu0 0.0
  %1000 = vmatprep.subr.mxu0 0.0
  %1001 = vmatpush1.msra.mxu0 0.0
  %1002 = vmatprep.subr.mxu0 0.0
  %1003 = vmatpush1.msra.mxu0 0.0
  %1004 = vmatprep.subr.mxu0 0.0
  %1005 = vmatpush1.msra.mxu0 0.0
  %1006 = vmatprep.subr.mxu0 0.0
  %1007 = vmatpush1.msra.mxu0 0.0
  %1008 = vmatprep.subr.mxu0 0.0
  %1009 = vmatpush1.msra.mxu0 0.0
  %1010 = vmatprep.subr.mxu0 0.0
  %1011 = vmatpush1.msra.mxu0 %v949
  %1012 = vmatprep.subr.mxu0 0.0
  %1013 = vmatpush2.msra.mxu0 0.0
  %1014 = vmatprep.subr.mxu0 0.0
  %1015 = vmatpush2.msra.mxu0 0.0
  %1016 = vmatprep.subr.mxu0 0.0
  %1017 = vmatpush2.msra.mxu0 0.0
  %1018 = vmatprep.subr.mxu0 0.0
  %1019 = vmatpush2.msra.mxu0 0.0
  %1020 = vmatprep.subr.mxu0 0.0
  %1021 = vmatpush2.msra.mxu0 0.0
  %1022 = vmatprep.subr.mxu0 0.0
  %1023 = vmatpush2.msra.mxu0 0.0
  %1024 = vmatprep.subr.mxu0 0.0
  %1025 = vmatpush2.msra.mxu0 0.0
  %1026 = vmatprep.subr.mxu0 0.0
  %1027 = vmatpush2.msra.mxu0 0.0
  %1028 = vmatprep.subr.mxu0 0.0
  %1029 = vmatpush2.msra.mxu0 0.0
  %1030 = vmatprep.subr.mxu0 0.0
  %1031 = vmatpush2.msra.mxu0 0.0
  %1032 = vmatprep.subr.mxu0 0.0
  %1033 = vmatpush2.msra.mxu0 0.0
  %1034 = vmatprep.subr.mxu0 0.0
  %1035 = vmatpush2.msra.mxu0 0.0
  %1036 = vmatprep.subr.mxu0 0.0
  %1037 = vmatpush2.msra.mxu0 0.0
  %1038 = vmatprep.subr.mxu0 0.0
  %1039 = vmatpush2.msra.mxu0 0.0
  %1040 = vmatprep.subr.mxu0 0.0
  %1041 = vmatpush2.msra.mxu0 0.0
  %1042 = vmatprep.subr.mxu0 0.0
  %1043 = vmatpush2.msra.mxu0 0.0
  %1044 = vmatprep.mubr.f32.mxu0 0.0
  %1045 = vmatmul.mubr.f32.gmra.mxu0 %v957
  %v1046 = vpop.f32.mrf.mxu0
  %v1047 = vadd.f32 %v954, %v1046
  %v1048 = vpop.f32.mrf.mxu0
  %1049 = vmatprep.mubr.f32.mxu0 0.0
  %1050 = vmatmul.mubr.f32.gmra.mxu0 %v960
  %v1051 = vpop.f32.mrf.mxu0
  %v1052 = vadd.f32 %v954, %v1051
  %v1053 = vpop.f32.mrf.mxu0
  %1054 = vmatprep.mubr.f32.mxu0 0.0
  %1055 = vmatmul.mubr.f32.gmra.mxu0 %v963
  %v1056 = vpop.f32.mrf.mxu0
  %v1057 = vadd.f32 %v954, %v1056
  %v1058 = vpop.f32.mrf.mxu0
  %1059 = vmatprep.mubr.f32.mxu0 0.0
  %1060 = vmatmul.mubr.f32.gmra.mxu0 %v966
  %v1061 = vpop.f32.mrf.mxu0
  %v1062 = vadd.f32 %v954, %v1061
  %v1063 = vpop.f32.mrf.mxu0
  %1064 = vmatprep.mubr.f32.mxu0 0.0
  %1065 = vmatmul.mubr.f32.gmra.mxu0 %v969
  %v1066 = vpop.f32.mrf.mxu0
  %v1067 = vadd.f32 %v954, %v1066
  %v1068 = vpop.f32.mrf.mxu0
  %1069 = vmatprep.mubr.f32.mxu0 0.0
  %1070 = vmatmul.mubr.f32.gmra.mxu0 %v972
  %v1071 = vpop.f32.mrf.mxu0
  %v1072 = vadd.f32 %v954, %v1071
  %v1073 = vpop.f32.mrf.mxu0
  %1074 = vmatprep.mubr.f32.mxu0 0.0
  %1075 = vmatmul.mubr.f32.gmra.mxu0 %v975
  %v1076 = vpop.f32.mrf.mxu0
  %v1077 = vadd.f32 %v954, %v1076
  %v1078 = vpop.f32.mrf.mxu0
  %1079 = vmatprep.mubr.f32.mxu0 0.0
  %1080 = vmatmul.mubr.f32.gmra.mxu0 %v978
  %v1081 = vpop.f32.mrf.mxu0
  %v1082 = vadd.f32 %v954, %v1081
  %v1083 = vpop.f32.mrf.mxu0
  %1084 = vdwg.mxu0
  %v1085 = vmax.f32 %v1047, 0.0
  %v1086 = vmax.f32 %v1052, 0.0
  %v1087 = vmax.f32 %v1057, 0.0
  %v1088 = vmax.f32 %v1062, 0.0
  %v1089 = vmax.f32 %v1067, 0.0
  %v1090 = vmax.f32 %v1072, 0.0
  %v1091 = vmax.f32 %v1077, 0.0
  %v1092 = vmax.f32 %v1082, 0.0
  %v1093 = vsel %vm955, %v1085, 0.0
  %v1094 = vsel %vm955, %v1086, 0.0
  %v1095 = vadd.f32 %v1093, %v1094
  %v1096 = vsel %vm955, %v1087, 0.0
  %v1097 = vadd.f32 %v1095, %v1096
  %v1098 = vsel %vm955, %v1088, 0.0
  %v1099 = vadd.f32 %v1097, %v1098
  %v1100 = vsel %vm955, %v1089, 0.0
  %v1101 = vadd.f32 %v1099, %v1100
  %v1102 = vsel %vm955, %v1090, 0.0
  %v1103 = vadd.f32 %v1101, %v1102
  %v1104 = vsel %vm955, %v1091, 0.0
  %v1105 = vadd.f32 %v1103, %v1104
  %v1106 = vsel %vm955, %v1092, 0.0
  %v1107 = vadd.f32 %v1105, %v1106
  %v1108 = vrot.slane %v1107, 4
  %v1109 = vadd.f32 %v1107, %v1108
  %v1110 = vrot.slane %v1109, 2
  %v1111 = vadd.f32 %v1109, %v1110
  %v1112 = vrot.slane %v1111, 1
  %v1113 = vadd.f32 %v1111, %v1112
  %v1114 = vmul.f32 %v1085, %v1085
  %v1115 = vmul.f32 %v1086, %v1086
  %v1116 = vmul.f32 %v1087, %v1087
  %v1117 = vmul.f32 %v1088, %v1088
  %v1118 = vmul.f32 %v1089, %v1089
  %v1119 = vmul.f32 %v1090, %v1090
  %v1120 = vmul.f32 %v1091, %v1091
  %v1121 = vmul.f32 %v1092, %v1092
  %v1122 = vsel %vm955, %v1114, 0.0
  %v1123 = vsel %vm955, %v1115, 0.0
  %v1124 = vadd.f32 %v1122, %v1123
  %v1125 = vsel %vm955, %v1116, 0.0
  %v1126 = vadd.f32 %v1124, %v1125
  %v1127 = vsel %vm955, %v1117, 0.0
  %v1128 = vadd.f32 %v1126, %v1127
  %v1129 = vsel %vm955, %v1118, 0.0
  %v1130 = vadd.f32 %v1128, %v1129
  %v1131 = vsel %vm955, %v1119, 0.0
  %v1132 = vadd.f32 %v1130, %v1131
  %v1133 = vsel %vm955, %v1120, 0.0
  %v1134 = vadd.f32 %v1132, %v1133
  %v1135 = vsel %vm955, %v1121, 0.0
  %v1136 = vadd.f32 %v1134, %v1135
  %v1137 = vrot.slane %v1136, 4
  %v1138 = vadd.f32 %v1136, %v1137
  %v1139 = vrot.slane %v1138, 2
  %v1140 = vadd.f32 %v1138, %v1139
  %v1141 = vrot.slane %v1140, 1
  %v1142 = vadd.f32 %v1140, %v1141
  %v1143 = vmul.f32 %v1113, 0.015625
  %v1144 = vmul.f32 %v1142, 0.015625
  %v1145 = vmul.f32 %v1143, %v1143
  %v1146 = vsub.f32 %v1144, %v1145
  %v1147 = vmax.f32 %v1146, 0.0
  %v1148 = vld [vmem:[%s2 + $0xb] sm:$0x1]
  %v1149 = vld [vmem:[%s2 + $0xc] sm:$0x1]
  %v1150 = vadd.f32 %v1147, 1e-05
  %v1151 = vrsqrt.pop %v1150
  %v1152 = vmul.f32 %v1148, %v1151
  %v1153 = vmul.f32 %v1143, %v1152
  %v1154 = vsub.f32 %v1149, %v1153
  %v1155 = vlaneseq
  %v1156 = vshrl.u32 %v1155, 7
  %v1157 = vsub.s32 0, %v1156
  %v1158 = vrot.slane %v1152, %v1157
  %v1159 = vmul.f32 %v1085, %v1158
  %v1160 = vmul.f32 %v1086, %v1158
  %v1161 = vmul.f32 %v1087, %v1158
  %v1162 = vmul.f32 %v1088, %v1158
  %v1163 = vmul.f32 %v1089, %v1158
  %v1164 = vmul.f32 %v1090, %v1158
  %v1165 = vmul.f32 %v1091, %v1158
  %v1166 = vmul.f32 %v1092, %v1158
  %v1167 = vlaneseq
  %v1168 = vshrl.u32 %v1167, 7
  %v1169 = vsub.s32 0, %v1168
  %v1170 = vrot.slane %v1154, %v1169
  %v1171 = vadd.f32 %v1159, %v1170
  %v1172 = vadd.f32 %v1160, %v1170
  %v1173 = vadd.f32 %v1161, %v1170
  %v1174 = vadd.f32 %v1162, %v1170
  %v1175 = vadd.f32 %v1163, %v1170
  %v1176 = vadd.f32 %v1164, %v1170
  %v1177 = vadd.f32 %v1165, %v1170
  %v1178 = vadd.f32 %v1166, %v1170
  %v1179 = vld [vmem:[%s1 + $0x90] sm:$0xff]
  %v1180 = vld [vmem:[%s2 + $0xd] sm:$0x1]
  %v1181 = vlaneseq
  %v1182 = vshrl.u32 %v1181, 7
  %v1183 = vsub.s32 0, %v1182
  %v1184 = vrot.slane %v1180, %v1183
  %v1186 = vsel %vm955, %v1171, 0
  %v1189 = vsel %vm955, %v1172, 0
  %v1192 = vsel %vm955, %v1173, 0
  %v1195 = vsel %vm955, %v1174, 0
  %v1198 = vsel %vm955, %v1175, 0
  %v1201 = vsel %vm955, %v1176, 0
  %v1204 = vsel %vm955, %v1177, 0
  %v1207 = vsel %vm955, %v1178, 0
  %1209 = vmatprep.subr.mxu0 0.0
  %1210 = vmatpush1.msra.mxu0 0.0
  %1211 = vmatprep.subr.mxu0 0.0
  %1212 = vmatpush1.msra.mxu0 0.0
  %1213 = vmatprep.subr.mxu0 0.0
  %1214 = vmatpush1.msra.mxu0 0.0
  %1215 = vmatprep.subr.mxu0 0.0
  %1216 = vmatpush1.msra.mxu0 0.0
  %1217 = vmatprep.subr.mxu0 0.0
  %1218 = vmatpush1.msra.mxu0 0.0
  %1219 = vmatprep.subr.mxu0 0.0
  %1220 = vmatpush1.msra.mxu0 0.0
  %1221 = vmatprep.subr.mxu0 0.0
  %1222 = vmatpush1.msra.mxu0 0.0
  %1223 = vmatprep.subr.mxu0 0.0
  %1224 = vmatpush1.msra.mxu0 0.0
  %1225 = vmatprep.subr.mxu0 0.0
  %1226 = vmatpush1.msra.mxu0 0.0
  %1227 = vmatprep.subr.mxu0 0.0
  %1228 = vmatpush1.msra.mxu0 0.0
  %1229 = vmatprep.subr.mxu0 0.0
  %1230 = vmatpush1.msra.mxu0 0.0
  %1231 = vmatprep.subr.mxu0 0.0
  %1232 = vmatpush1.msra.mxu0 0.0
  %1233 = vmatprep.subr.mxu0 0.0
  %1234 = vmatpush1.msra.mxu0 0.0
  %1235 = vmatprep.subr.mxu0 0.0
  %1236 = vmatpush1.msra.mxu0 0.0
  %1237 = vmatprep.subr.mxu0 0.0
  %1238 = vmatpush1.msra.mxu0 0.0
  %1239 = vmatprep.subr.mxu0 0.0
  %1240 = vmatpush1.msra.mxu0 %v1179
  %1241 = vmatprep.subr.mxu0 0.0
  %1242 = vmatpush2.msra.mxu0 0.0
  %1243 = vmatprep.subr.mxu0 0.0
  %1244 = vmatpush2.msra.mxu0 0.0
  %1245 = vmatprep.subr.mxu0 0.0
  %1246 = vmatpush2.msra.mxu0 0.0
  %1247 = vmatprep.subr.mxu0 0.0
  %1248 = vmatpush2.msra.mxu0 0.0
  %1249 = vmatprep.subr.mxu0 0.0
  %1250 = vmatpush2.msra.mxu0 0.0
  %1251 = vmatprep.subr.mxu0 0.0
  %1252 = vmatpush2.msra.mxu0 0.0
  %1253 = vmatprep.subr.mxu0 0.0
  %1254 = vmatpush2.msra.mxu0 0.0
  %1255 = vmatprep.subr.mxu0 0.0
  %1256 = vmatpush2.msra.mxu0 0.0
  %1257 = vmatprep.subr.mxu0 0.0
  %1258 = vmatpush2.msra.mxu0 0.0
  %1259 = vmatprep.subr.mxu0 0.0
  %1260 = vmatpush2.msra.mxu0 0.0
  %1261 = vmatprep.subr.mxu0 0.0
  %1262 = vmatpush2.msra.mxu0 0.0
  %1263 = vmatprep.subr.mxu0 0.0
  %1264 = vmatpush2.msra.mxu0 0.0
  %1265 = vmatprep.subr.mxu0 0.0
  %1266 = vmatpush2.msra.mxu0 0.0
  %1267 = vmatprep.subr.mxu0 0.0
  %1268 = vmatpush2.msra.mxu0 0.0
  %1269 = vmatprep.subr.mxu0 0.0
  %1270 = vmatpush2.msra.mxu0 0.0
  %1271 = vmatprep.subr.mxu0 0.0
  %1272 = vmatpush2.msra.mxu0 0.0
  %1273 = vmatprep.mubr.f32.mxu0 0.0
  %1274 = vmatmul.mubr.f32.gmra.mxu0 %v1186
  %v1275 = vpop.f32.mrf.mxu0
  %v1276 = vadd.f32 %v1184, %v1275
  %v1277 = vpop.f32.mrf.mxu0
  %1278 = vmatprep.mubr.f32.mxu0 0.0
  %1279 = vmatmul.mubr.f32.gmra.mxu0 %v1189
  %v1280 = vpop.f32.mrf.mxu0
  %v1281 = vadd.f32 %v1184, %v1280
  %v1282 = vpop.f32.mrf.mxu0
  %1283 = vmatprep.mubr.f32.mxu0 0.0
  %1284 = vmatmul.mubr.f32.gmra.mxu0 %v1192
  %v1285 = vpop.f32.mrf.mxu0
  %v1286 = vadd.f32 %v1184, %v1285
  %v1287 = vpop.f32.mrf.mxu0
  %1288 = vmatprep.mubr.f32.mxu0 0.0
  %1289 = vmatmul.mubr.f32.gmra.mxu0 %v1195
  %v1290 = vpop.f32.mrf.mxu0
  %v1291 = vadd.f32 %v1184, %v1290
  %v1292 = vpop.f32.mrf.mxu0
  %1293 = vmatprep.mubr.f32.mxu0 0.0
  %1294 = vmatmul.mubr.f32.gmra.mxu0 %v1198
  %v1295 = vpop.f32.mrf.mxu0
  %v1296 = vadd.f32 %v1184, %v1295
  %v1297 = vpop.f32.mrf.mxu0
  %1298 = vmatprep.mubr.f32.mxu0 0.0
  %1299 = vmatmul.mubr.f32.gmra.mxu0 %v1201
  %v1300 = vpop.f32.mrf.mxu0
  %v1301 = vadd.f32 %v1184, %v1300
  %v1302 = vpop.f32.mrf.mxu0
  %1303 = vmatprep.mubr.f32.mxu0 0.0
  %1304 = vmatmul.mubr.f32.gmra.mxu0 %v1204
  %v1305 = vpop.f32.mrf.mxu0
  %v1306 = vadd.f32 %v1184, %v1305
  %v1307 = vpop.f32.mrf.mxu0
  %1308 = vmatprep.mubr.f32.mxu0 0.0
  %1309 = vmatmul.mubr.f32.gmra.mxu0 %v1207
  %v1310 = vpop.f32.mrf.mxu0
  %v1311 = vadd.f32 %v1184, %v1310
  %v1312 = vpop.f32.mrf.mxu0
  %1313 = vdwg.mxu0
  %v1314 = vmax.f32 %v1276, 0.0
  %v1315 = vmax.f32 %v1281, 0.0
  %v1316 = vmax.f32 %v1286, 0.0
  %v1317 = vmax.f32 %v1291, 0.0
  %v1318 = vmax.f32 %v1296, 0.0
  %v1319 = vmax.f32 %v1301, 0.0
  %v1320 = vmax.f32 %v1306, 0.0
  %v1321 = vmax.f32 %v1311, 0.0
  %vm1322 = vcmask 31744
  %v1323 = vsel %vm1322, %v1314, 0.0
  %v1324 = vsel %vm1322, %v1315, 0.0
  %v1325 = vadd.f32 %v1323, %v1324
  %v1326 = vsel %vm1322, %v1316, 0.0
  %v1327 = vadd.f32 %v1325, %v1326
  %v1328 = vsel %vm1322, %v1317, 0.0
  %v1329 = vadd.f32 %v1327, %v1328
  %v1330 = vsel %vm1322, %v1318, 0.0
  %v1331 = vadd.f32 %v1329, %v1330
  %v1332 = vsel %vm1322, %v1319, 0.0
  %v1333 = vadd.f32 %v1331, %v1332
  %v1334 = vsel %vm1322, %v1320, 0.0
  %v1335 = vadd.f32 %v1333, %v1334
  %v1336 = vsel %vm1322, %v1321, 0.0
  %v1337 = vadd.f32 %v1335, %v1336
  %v1338 = vrot.slane %v1337, 4
  %v1339 = vadd.f32 %v1337, %v1338
  %v1340 = vrot.slane %v1339, 2
  %v1341 = vadd.f32 %v1339, %v1340
  %v1342 = vrot.slane %v1341, 1
  %v1343 = vadd.f32 %v1341, %v1342
  %v1344 = vmul.f32 %v1314, %v1314
  %v1345 = vmul.f32 %v1315, %v1315
  %v1346 = vmul.f32 %v1316, %v1316
  %v1347 = vmul.f32 %v1317, %v1317
  %v1348 = vmul.f32 %v1318, %v1318
  %v1349 = vmul.f32 %v1319, %v1319
  %v1350 = vmul.f32 %v1320, %v1320
  %v1351 = vmul.f32 %v1321, %v1321
  %v1352 = vsel %vm1322, %v1344, 0.0
  %v1353 = vsel %vm1322, %v1345, 0.0
  %v1354 = vadd.f32 %v1352, %v1353
  %v1355 = vsel %vm1322, %v1346, 0.0
  %v1356 = vadd.f32 %v1354, %v1355
  %v1357 = vsel %vm1322, %v1347, 0.0
  %v1358 = vadd.f32 %v1356, %v1357
  %v1359 = vsel %vm1322, %v1348, 0.0
  %v1360 = vadd.f32 %v1358, %v1359
  %v1361 = vsel %vm1322, %v1349, 0.0
  %v1362 = vadd.f32 %v1360, %v1361
  %v1363 = vsel %vm1322, %v1350, 0.0
  %v1364 = vadd.f32 %v1362, %v1363
  %v1365 = vsel %vm1322, %v1351, 0.0
  %v1366 = vadd.f32 %v1364, %v1365
  %v1367 = vrot.slane %v1366, 4
  %v1368 = vadd.f32 %v1366, %v1367
  %v1369 = vrot.slane %v1368, 2
  %v1370 = vadd.f32 %v1368, %v1369
  %v1371 = vrot.slane %v1370, 1
  %v1372 = vadd.f32 %v1370, %v1371
  %v1373 = vmul.f32 %v1343, 0.015625
  %v1374 = vmul.f32 %v1372, 0.015625
  %v1375 = vmul.f32 %v1373, %v1373
  %v1376 = vsub.f32 %v1374, %v1375
  %v1377 = vmax.f32 %v1376, 0.0
  %v1378 = vld [vmem:[%s2 + $0xe] sm:$0x1]
  %v1379 = vld [vmem:[%s2 + $0xf] sm:$0x1]
  %v1380 = vadd.f32 %v1377, 1e-05
  %v1381 = vrsqrt.pop %v1380
  %v1382 = vmul.f32 %v1378, %v1381
  %v1383 = vmul.f32 %v1373, %v1382
  %v1384 = vsub.f32 %v1379, %v1383
  %v1385 = vlaneseq
  %v1386 = vshrl.u32 %v1385, 7
  %v1387 = vsub.s32 0, %v1386
  %v1388 = vrot.slane %v1382, %v1387
  %v1389 = vmul.f32 %v1314, %v1388
  %v1390 = vmul.f32 %v1315, %v1388
  %v1391 = vmul.f32 %v1316, %v1388
  %v1392 = vmul.f32 %v1317, %v1388
  %v1393 = vmul.f32 %v1318, %v1388
  %v1394 = vmul.f32 %v1319, %v1388
  %v1395 = vmul.f32 %v1320, %v1388
  %v1396 = vmul.f32 %v1321, %v1388
  %v1397 = vlaneseq
  %v1398 = vshrl.u32 %v1397, 7
  %v1399 = vsub.s32 0, %v1398
  %v1400 = vrot.slane %v1384, %v1399
  %v1401 = vadd.f32 %v1389, %v1400
  %v1402 = vadd.f32 %v1390, %v1400
  %v1403 = vadd.f32 %v1391, %v1400
  %v1404 = vadd.f32 %v1392, %v1400
  %v1405 = vadd.f32 %v1393, %v1400
  %v1406 = vadd.f32 %v1394, %v1400
  %v1407 = vadd.f32 %v1395, %v1400
  %v1408 = vadd.f32 %v1396, %v1400
  %v1409 = vld [vmem:[%s1 + $0x98] sm:$0xf]
  %v1410 = vld [vmem:[%s2 + $0x10] sm:$0x1]
  %v1411 = vlaneseq
  %v1412 = vshrl.u32 %v1411, 7
  %v1413 = vsub.s32 0, %v1412
  %v1414 = vrot.slane %v1410, %v1413
  %v1416 = vsel %vm1322, %v1401, 0
  %v1419 = vsel %vm1322, %v1402, 0
  %v1422 = vsel %vm1322, %v1403, 0
  %v1425 = vsel %vm1322, %v1404, 0
  %v1428 = vsel %vm1322, %v1405, 0
  %v1431 = vsel %vm1322, %v1406, 0
  %v1434 = vsel %vm1322, %v1407, 0
  %v1437 = vsel %vm1322, %v1408, 0
  %v1440 = vsel %vm840, %v1409, 0
  %1442 = vmatprep.subr.mxu0 0.0
  %1443 = vmatpush1.msra.mxu0 0.0
  %1444 = vmatprep.subr.mxu0 0.0
  %1445 = vmatpush1.msra.mxu0 0.0
  %1446 = vmatprep.subr.mxu0 0.0
  %1447 = vmatpush1.msra.mxu0 0.0
  %1448 = vmatprep.subr.mxu0 0.0
  %1449 = vmatpush1.msra.mxu0 0.0
  %1450 = vmatprep.subr.mxu0 0.0
  %1451 = vmatpush1.msra.mxu0 0.0
  %1452 = vmatprep.subr.mxu0 0.0
  %1453 = vmatpush1.msra.mxu0 0.0
  %1454 = vmatprep.subr.mxu0 0.0
  %1455 = vmatpush1.msra.mxu0 0.0
  %1456 = vmatprep.subr.mxu0 0.0
  %1457 = vmatpush1.msra.mxu0 0.0
  %1458 = vmatprep.subr.mxu0 0.0
  %1459 = vmatpush1.msra.mxu0 0.0
  %1460 = vmatprep.subr.mxu0 0.0
  %1461 = vmatpush1.msra.mxu0 0.0
  %1462 = vmatprep.subr.mxu0 0.0
  %1463 = vmatpush1.msra.mxu0 0.0
  %1464 = vmatprep.subr.mxu0 0.0
  %1465 = vmatpush1.msra.mxu0 0.0
  %1466 = vmatprep.subr.mxu0 0.0
  %1467 = vmatpush1.msra.mxu0 0.0
  %1468 = vmatprep.subr.mxu0 0.0
  %1469 = vmatpush1.msra.mxu0 0.0
  %1470 = vmatprep.subr.mxu0 0.0
  %1471 = vmatpush1.msra.mxu0 0.0
  %1472 = vmatprep.subr.mxu0 0.0
  %1473 = vmatpush1.msra.mxu0 %v1440
  %1474 = vmatprep.subr.mxu0 0.0
  %1475 = vmatpush2.msra.mxu0 0.0
  %1476 = vmatprep.subr.mxu0 0.0
  %1477 = vmatpush2.msra.mxu0 0.0
  %1478 = vmatprep.subr.mxu0 0.0
  %1479 = vmatpush2.msra.mxu0 0.0
  %1480 = vmatprep.subr.mxu0 0.0
  %1481 = vmatpush2.msra.mxu0 0.0
  %1482 = vmatprep.subr.mxu0 0.0
  %1483 = vmatpush2.msra.mxu0 0.0
  %1484 = vmatprep.subr.mxu0 0.0
  %1485 = vmatpush2.msra.mxu0 0.0
  %1486 = vmatprep.subr.mxu0 0.0
  %1487 = vmatpush2.msra.mxu0 0.0
  %1488 = vmatprep.subr.mxu0 0.0
  %1489 = vmatpush2.msra.mxu0 0.0
  %1490 = vmatprep.subr.mxu0 0.0
  %1491 = vmatpush2.msra.mxu0 0.0
  %1492 = vmatprep.subr.mxu0 0.0
  %1493 = vmatpush2.msra.mxu0 0.0
  %1494 = vmatprep.subr.mxu0 0.0
  %1495 = vmatpush2.msra.mxu0 0.0
  %1496 = vmatprep.subr.mxu0 0.0
  %1497 = vmatpush2.msra.mxu0 0.0
  %1498 = vmatprep.subr.mxu0 0.0
  %1499 = vmatpush2.msra.mxu0 0.0
  %1500 = vmatprep.subr.mxu0 0.0
  %1501 = vmatpush2.msra.mxu0 0.0
  %1502 = vmatprep.subr.mxu0 0.0
  %1503 = vmatpush2.msra.mxu0 0.0
  %1504 = vmatprep.subr.mxu0 0.0
  %1505 = vmatpush2.msra.mxu0 0.0
  %1506 = vmatprep.mubr.f32.mxu0 0.0
  %1507 = vmatmul.mubr.f32.gmra.mxu0 %v1416
  %v1508 = vpop.f32.mrf.mxu0
  %v1509 = vadd.f32 %v1414, %v1508
  %v1510 = vpop.f32.mrf.mxu0
  %1511 = vmatprep.mubr.f32.mxu0 0.0
  %1512 = vmatmul.mubr.f32.gmra.mxu0 %v1419
  %v1513 = vpop.f32.mrf.mxu0
  %v1514 = vadd.f32 %v1414, %v1513
  %v1515 = vpop.f32.mrf.mxu0
  %1516 = vmatprep.mubr.f32.mxu0 0.0
  %1517 = vmatmul.mubr.f32.gmra.mxu0 %v1422
  %v1518 = vpop.f32.mrf.mxu0
  %v1519 = vadd.f32 %v1414, %v1518
  %v1520 = vpop.f32.mrf.mxu0
  %1521 = vmatprep.mubr.f32.mxu0 0.0
  %1522 = vmatmul.mubr.f32.gmra.mxu0 %v1425
  %v1523 = vpop.f32.mrf.mxu0
  %v1524 = vadd.f32 %v1414, %v1523
  %v1525 = vpop.f32.mrf.mxu0
  %1526 = vmatprep.mubr.f32.mxu0 0.0
  %1527 = vmatmul.mubr.f32.gmra.mxu0 %v1428
  %v1528 = vpop.f32.mrf.mxu0
  %v1529 = vadd.f32 %v1414, %v1528
  %v1530 = vpop.f32.mrf.mxu0
  %1531 = vmatprep.mubr.f32.mxu0 0.0
  %1532 = vmatmul.mubr.f32.gmra.mxu0 %v1431
  %v1533 = vpop.f32.mrf.mxu0
  %v1534 = vadd.f32 %v1414, %v1533
  %v1535 = vpop.f32.mrf.mxu0
  %1536 = vmatprep.mubr.f32.mxu0 0.0
  %1537 = vmatmul.mubr.f32.gmra.mxu0 %v1434
  %v1538 = vpop.f32.mrf.mxu0
  %v1539 = vadd.f32 %v1414, %v1538
  %v1540 = vpop.f32.mrf.mxu0
  %1541 = vmatprep.mubr.f32.mxu0 0.0
  %1542 = vmatmul.mubr.f32.gmra.mxu0 %v1437
  %v1543 = vpop.f32.mrf.mxu0
  %v1544 = vadd.f32 %v1414, %v1543
  %v1545 = vpop.f32.mrf.mxu0
  %1546 = vdwg.mxu0
  %v1547 = vmax.f32 %v1509, 0.0
  %v1548 = vmax.f32 %v1514, 0.0
  %v1549 = vmax.f32 %v1519, 0.0
  %v1550 = vmax.f32 %v1524, 0.0
  %v1551 = vmax.f32 %v1529, 0.0
  %v1552 = vmax.f32 %v1534, 0.0
  %v1553 = vmax.f32 %v1539, 0.0
  %v1554 = vmax.f32 %v1544, 0.0
  %v1555 = vsel %vm1322, %v1547, 0.0
  %v1556 = vsel %vm1322, %v1548, 0.0
  %v1557 = vadd.f32 %v1555, %v1556
  %v1558 = vsel %vm1322, %v1549, 0.0
  %v1559 = vadd.f32 %v1557, %v1558
  %v1560 = vsel %vm1322, %v1550, 0.0
  %v1561 = vadd.f32 %v1559, %v1560
  %v1562 = vsel %vm1322, %v1551, 0.0
  %v1563 = vadd.f32 %v1561, %v1562
  %v1564 = vsel %vm1322, %v1552, 0.0
  %v1565 = vadd.f32 %v1563, %v1564
  %v1566 = vsel %vm1322, %v1553, 0.0
  %v1567 = vadd.f32 %v1565, %v1566
  %v1568 = vsel %vm1322, %v1554, 0.0
  %v1569 = vadd.f32 %v1567, %v1568
  %v1570 = vrot.slane %v1569, 4
  %v1571 = vadd.f32 %v1569, %v1570
  %v1572 = vrot.slane %v1571, 2
  %v1573 = vadd.f32 %v1571, %v1572
  %v1574 = vrot.slane %v1573, 1
  %v1575 = vadd.f32 %v1573, %v1574
  %v1576 = vmul.f32 %v1547, %v1547
  %v1577 = vmul.f32 %v1548, %v1548
  %v1578 = vmul.f32 %v1549, %v1549
  %v1579 = vmul.f32 %v1550, %v1550
  %v1580 = vmul.f32 %v1551, %v1551
  %v1581 = vmul.f32 %v1552, %v1552
  %v1582 = vmul.f32 %v1553, %v1553
  %v1583 = vmul.f32 %v1554, %v1554
  %v1584 = vsel %vm1322, %v1576, 0.0
  %v1585 = vsel %vm1322, %v1577, 0.0
  %v1586 = vadd.f32 %v1584, %v1585
  %v1587 = vsel %vm1322, %v1578, 0.0
  %v1588 = vadd.f32 %v1586, %v1587
  %v1589 = vsel %vm1322, %v1579, 0.0
  %v1590 = vadd.f32 %v1588, %v1589
  %v1591 = vsel %vm1322, %v1580, 0.0
  %v1592 = vadd.f32 %v1590, %v1591
  %v1593 = vsel %vm1322, %v1581, 0.0
  %v1594 = vadd.f32 %v1592, %v1593
  %v1595 = vsel %vm1322, %v1582, 0.0
  %v1596 = vadd.f32 %v1594, %v1595
  %v1597 = vsel %vm1322, %v1583, 0.0
  %v1598 = vadd.f32 %v1596, %v1597
  %v1599 = vrot.slane %v1598, 4
  %v1600 = vadd.f32 %v1598, %v1599
  %v1601 = vrot.slane %v1600, 2
  %v1602 = vadd.f32 %v1600, %v1601
  %v1603 = vrot.slane %v1602, 1
  %v1604 = vadd.f32 %v1602, %v1603
  %v1605 = vmul.f32 %v1575, 0.015625
  %v1606 = vmul.f32 %v1604, 0.015625
  %v1607 = vmul.f32 %v1605, %v1605
  %v1608 = vsub.f32 %v1606, %v1607
  %v1609 = vmax.f32 %v1608, 0.0
  %v1610 = vld [vmem:[%s2 + $0x11] sm:$0x1]
  %v1611 = vld [vmem:[%s2 + $0x12] sm:$0x1]
  %v1612 = vadd.f32 %v1609, 1e-05
  %v1613 = vrsqrt.pop %v1612
  %v1614 = vmul.f32 %v1610, %v1613
  %v1615 = vmul.f32 %v1605, %v1614
  %v1616 = vsub.f32 %v1611, %v1615
  %v1617 = vlaneseq
  %v1618 = vshrl.u32 %v1617, 7
  %v1619 = vsub.s32 0, %v1618
  %v1620 = vrot.slane %v1614, %v1619
  %v1621 = vmul.f32 %v1547, %v1620
  %v1622 = vmul.f32 %v1548, %v1620
  %v1623 = vmul.f32 %v1549, %v1620
  %v1624 = vmul.f32 %v1550, %v1620
  %v1625 = vmul.f32 %v1551, %v1620
  %v1626 = vmul.f32 %v1552, %v1620
  %v1627 = vmul.f32 %v1553, %v1620
  %v1628 = vmul.f32 %v1554, %v1620
  %v1629 = vlaneseq
  %v1630 = vshrl.u32 %v1629, 7
  %v1631 = vsub.s32 0, %v1630
  %v1632 = vrot.slane %v1616, %v1631
  %v1633 = vadd.f32 %v1621, %v1632
  %v1634 = vadd.f32 %v1622, %v1632
  %v1635 = vadd.f32 %v1623, %v1632
  %v1636 = vadd.f32 %v1624, %v1632
  %v1637 = vadd.f32 %v1625, %v1632
  %v1638 = vadd.f32 %v1626, %v1632
  %v1639 = vadd.f32 %v1627, %v1632
  %v1640 = vadd.f32 %v1628, %v1632
  %v1641 = vld [vmem:[%s1 + $0xa0] sm:$0xf]
  %v1642 = vld [vmem:[%s2 + $0x13] sm:$0x1]
  %v1643 = vlaneseq
  %v1644 = vshrl.u32 %v1643, 7
  %v1645 = vsub.s32 0, %v1644
  %v1646 = vrot.slane %v1642, %v1645
  %v1648 = vsel %vm1322, %v1633, 0
  %v1651 = vsel %vm1322, %v1634, 0
  %v1654 = vsel %vm1322, %v1635, 0
  %v1657 = vsel %vm1322, %v1636, 0
  %v1660 = vsel %vm1322, %v1637, 0
  %v1663 = vsel %vm1322, %v1638, 0
  %v1666 = vsel %vm1322, %v1639, 0
  %v1669 = vsel %vm1322, %v1640, 0
  %v1672 = vsel %vm840, %v1641, 0
  %1674 = vmatprep.subr.mxu0 0.0
  %1675 = vmatpush1.msra.mxu0 0.0
  %1676 = vmatprep.subr.mxu0 0.0
  %1677 = vmatpush1.msra.mxu0 0.0
  %1678 = vmatprep.subr.mxu0 0.0
  %1679 = vmatpush1.msra.mxu0 0.0
  %1680 = vmatprep.subr.mxu0 0.0
  %1681 = vmatpush1.msra.mxu0 0.0
  %1682 = vmatprep.subr.mxu0 0.0
  %1683 = vmatpush1.msra.mxu0 0.0
  %1684 = vmatprep.subr.mxu0 0.0
  %1685 = vmatpush1.msra.mxu0 0.0
  %1686 = vmatprep.subr.mxu0 0.0
  %1687 = vmatpush1.msra.mxu0 0.0
  %1688 = vmatprep.subr.mxu0 0.0
  %1689 = vmatpush1.msra.mxu0 0.0
  %1690 = vmatprep.subr.mxu0 0.0
  %1691 = vmatpush1.msra.mxu0 0.0
  %1692 = vmatprep.subr.mxu0 0.0
  %1693 = vmatpush1.msra.mxu0 0.0
  %1694 = vmatprep.subr.mxu0 0.0
  %1695 = vmatpush1.msra.mxu0 0.0
  %1696 = vmatprep.subr.mxu0 0.0
  %1697 = vmatpush1.msra.mxu0 0.0
  %1698 = vmatprep.subr.mxu0 0.0
  %1699 = vmatpush1.msra.mxu0 0.0
  %1700 = vmatprep.subr.mxu0 0.0
  %1701 = vmatpush1.msra.mxu0 0.0
  %1702 = vmatprep.subr.mxu0 0.0
  %1703 = vmatpush1.msra.mxu0 0.0
  %1704 = vmatprep.subr.mxu0 0.0
  %1705 = vmatpush1.msra.mxu0 %v1672
  %1706 = vmatprep.subr.mxu0 0.0
  %1707 = vmatpush2.msra.mxu0 0.0
  %1708 = vmatprep.subr.mxu0 0.0
  %1709 = vmatpush2.msra.mxu0 0.0
  %1710 = vmatprep.subr.mxu0 0.0
  %1711 = vmatpush2.msra.mxu0 0.0
  %1712 = vmatprep.subr.mxu0 0.0
  %1713 = vmatpush2.msra.mxu0 0.0
  %1714 = vmatprep.subr.mxu0 0.0
  %1715 = vmatpush2.msra.mxu0 0.0
  %1716 = vmatprep.subr.mxu0 0.0
  %1717 = vmatpush2.msra.mxu0 0.0
  %1718 = vmatprep.subr.mxu0 0.0
  %1719 = vmatpush2.msra.mxu0 0.0
  %1720 = vmatprep.subr.mxu0 0.0
  %1721 = vmatpush2.msra.mxu0 0.0
  %1722 = vmatprep.subr.mxu0 0.0
  %1723 = vmatpush2.msra.mxu0 0.0
  %1724 = vmatprep.subr.mxu0 0.0
  %1725 = vmatpush2.msra.mxu0 0.0
  %1726 = vmatprep.subr.mxu0 0.0
  %1727 = vmatpush2.msra.mxu0 0.0
  %1728 = vmatprep.subr.mxu0 0.0
  %1729 = vmatpush2.msra.mxu0 0.0
  %1730 = vmatprep.subr.mxu0 0.0
  %1731 = vmatpush2.msra.mxu0 0.0
  %1732 = vmatprep.subr.mxu0 0.0
  %1733 = vmatpush2.msra.mxu0 0.0
  %1734 = vmatprep.subr.mxu0 0.0
  %1735 = vmatpush2.msra.mxu0 0.0
  %1736 = vmatprep.subr.mxu0 0.0
  %1737 = vmatpush2.msra.mxu0 0.0
  %1738 = vmatprep.mubr.f32.mxu0 0.0
  %1739 = vmatmul.mubr.f32.gmra.mxu0 %v1648
  %v1740 = vpop.f32.mrf.mxu0
  %v1741 = vadd.f32 %v1646, %v1740
  %v1742 = vpop.f32.mrf.mxu0
  %1743 = vmatprep.mubr.f32.mxu0 0.0
  %1744 = vmatmul.mubr.f32.gmra.mxu0 %v1651
  %v1745 = vpop.f32.mrf.mxu0
  %v1746 = vadd.f32 %v1646, %v1745
  %v1747 = vpop.f32.mrf.mxu0
  %1748 = vmatprep.mubr.f32.mxu0 0.0
  %1749 = vmatmul.mubr.f32.gmra.mxu0 %v1654
  %v1750 = vpop.f32.mrf.mxu0
  %v1751 = vadd.f32 %v1646, %v1750
  %v1752 = vpop.f32.mrf.mxu0
  %1753 = vmatprep.mubr.f32.mxu0 0.0
  %1754 = vmatmul.mubr.f32.gmra.mxu0 %v1657
  %v1755 = vpop.f32.mrf.mxu0
  %v1756 = vadd.f32 %v1646, %v1755
  %v1757 = vpop.f32.mrf.mxu0
  %1758 = vmatprep.mubr.f32.mxu0 0.0
  %1759 = vmatmul.mubr.f32.gmra.mxu0 %v1660
  %v1760 = vpop.f32.mrf.mxu0
  %v1761 = vadd.f32 %v1646, %v1760
  %v1762 = vpop.f32.mrf.mxu0
  %1763 = vmatprep.mubr.f32.mxu0 0.0
  %1764 = vmatmul.mubr.f32.gmra.mxu0 %v1663
  %v1765 = vpop.f32.mrf.mxu0
  %v1766 = vadd.f32 %v1646, %v1765
  %v1767 = vpop.f32.mrf.mxu0
  %1768 = vmatprep.mubr.f32.mxu0 0.0
  %1769 = vmatmul.mubr.f32.gmra.mxu0 %v1666
  %v1770 = vpop.f32.mrf.mxu0
  %v1771 = vadd.f32 %v1646, %v1770
  %v1772 = vpop.f32.mrf.mxu0
  %1773 = vmatprep.mubr.f32.mxu0 0.0
  %1774 = vmatmul.mubr.f32.gmra.mxu0 %v1669
  %v1775 = vpop.f32.mrf.mxu0
  %v1776 = vadd.f32 %v1646, %v1775
  %v1777 = vpop.f32.mrf.mxu0
  %1778 = vdwg.mxu0
  %v1779 = vmax.f32 %v1741, 0.0
  %v1780 = vmax.f32 %v1746, 0.0
  %v1781 = vmax.f32 %v1751, 0.0
  %v1782 = vmax.f32 %v1756, 0.0
  %v1783 = vmax.f32 %v1761, 0.0
  %v1784 = vmax.f32 %v1766, 0.0
  %v1785 = vmax.f32 %v1771, 0.0
  %v1786 = vmax.f32 %v1776, 0.0
  %1787 = vst.msk [vmem:[%s3] sm:$0xff] %vm1322, %v1779
  %1788 = vst.msk [vmem:[%s3 + $0x8] sm:$0xff] %vm1322, %v1780
  %1789 = vst.msk [vmem:[%s3 + $0x10] sm:$0xff] %vm1322, %v1781
  %1790 = vst.msk [vmem:[%s3 + $0x18] sm:$0xff] %vm1322, %v1782
  %1791 = vst.msk [vmem:[%s3 + $0x20] sm:$0xff] %vm1322, %v1783
  %1792 = vst.msk [vmem:[%s3 + $0x28] sm:$0xff] %vm1322, %v1784
  %1793 = vst.msk [vmem:[%s3 + $0x30] sm:$0xff] %vm1322, %v1785
  %1794 = vst.msk [vmem:[%s3 + $0x38] sm:$0xff] %vm1322, %v1786
  // Predicated region
  $region14: #{mlp_model_forward.1} parent=0 // pred_check
    _
  $region15: #{mlp_model_forward.1} parent=0 // pred_check_branch
    %1796 = sbr.rel (0) target = $region17
  $region16: #{mlp_model_forward.1} parent=0 // pred_region
    _
  $region17: #{mlp_model_forward.1} parent=0 // pred_fallthru
    _
  // Predicated region
  $region18: #{mlp_model_forward.1} parent=0 // pred_check
    _
  $region19: #{mlp_model_forward.1} parent=0 // pred_check_branch
    %1798 = sbr.rel (0) target = $region21
  $region20: #{mlp_model_forward.1} parent=0 // pred_region
    _
  $region21: #{mlp_model_forward.1} parent=0 // pred_fallthru
    _

</llo_original>
